<compile_context>
chip_gen: v5e
topology: v5e:2x2
jax: 0.10.0
libtpu: 0.0.40
codegen_flags: <defaults>
</compile_context>

<pallas_src>
import functools

import jax
import jax.numpy as jnp
from jax.experimental import pallas as pl
from jax.experimental.pallas import tpu as pltpu

PAD = 128       # padded hidden-feature width (lanes)
TM_MAX = 4096   # max rows (points) per grid step


def _round_up(a, b):
    return ((a + b - 1) // b) * b


def _sigmoid(h):
    # logistic(x) == 0.5 * tanh(0.5 * x) + 0.5 : one EUP tanh + one VPU FMA,
    # instead of exp + full-precision reciprocal.
    return 0.5 * jnp.tanh(0.5 * h) + 0.5


def _tn_kernel(num_hidden, use_bias, compute_dtype, *refs):
    """refs = (x_ref, w1T_ref, wT_2..wT_L, wT_out, [b_1..b_L, b_out], o_ref).

    x_ref is (TM, 3); w1T_ref is (8, PAD) f32 (first 3 rows real); the other
    wT_* are pre-transposed, zero-padded (PAD, PAD) weights in `compute_dtype`
    so the hot path is a chain of dense MXU matmuls with no in-kernel
    transpose.  Biases are (1, PAD) f32.
    """
    x_ref = refs[0]
    idx = 1
    w1T_ref = refs[idx]; idx += 1
    wT_refs = refs[idx:idx + (num_hidden - 1)]; idx += num_hidden - 1
    wT_out_ref = refs[idx]; idx += 1
    if use_bias:
        b_refs = refs[idx:idx + num_hidden]; idx += num_hidden
        b_out_ref = refs[idx]; idx += 1
    o_ref = refs[idx]

    x = x_ref[...]                               # (TM, 3) f32

    # Layer 1: K=3 contraction as three lane-broadcast multiply-adds on the VPU
    # (avoids a 97%-zero padded MXU matmul and a 128-lane padded HBM read).
    h = (x[:, 0:1] * w1T_ref[0:1, :]
         + x[:, 1:2] * w1T_ref[1:2, :]
         + x[:, 2:3] * w1T_ref[2:3, :])          # (TM, PAD) f32
    if use_bias:
        h = h + b_refs[0][...]                   # (1, PAD) broadcasts over rows
    h = _sigmoid(h)

    # Remaining hidden layers: dense (TM,128)x(128,128) MXU matmuls, f32 acc.
    for l in range(num_hidden - 1):
        h = jnp.dot(h.astype(compute_dtype), wT_refs[l][...],
                    preferred_element_type=jnp.float32)
        if use_bias:
            h = h + b_refs[l + 1][...]
        h = _sigmoid(h)

    # Output layer (no activation); only the first 3 columns are real.
    out = jnp.dot(h.astype(compute_dtype), wT_out_ref[...],
                  preferred_element_type=jnp.float32)
    if use_bias:
        out = out + b_out_ref[...]
    o_ref[...] = out[:, :3]                      # narrow, lane-masked store


def _pad2(a, rows, cols):
    return jnp.zeros((rows, cols), a.dtype).at[:a.shape[0], :a.shape[1]].set(a)


def _split_flat_weights(weights, out_ch, use_bias):
    """Mirror of TargetNetwork._get_layer_data over the flat weight vector."""
    layers = []
    idx = 0

    def take(shape):
        nonlocal idx
        n = shape[0] * shape[1]
        w = weights[idx:idx + n].reshape(shape)
        idx2 = idx + n
        b = None
        if use_bias:
            b = weights[idx2:idx2 + shape[0]]
            idx2 += shape[0]
        idx = idx2
        return w, b

    layers.append(take((out_ch[0], 3)))                      # layer 1
    for x in range(1, len(out_ch)):                          # hidden layers
        layers.append(take((out_ch[x], out_ch[x - 1])))
    out_layer = take((3, out_ch[-1]))                        # output layer
    assert idx == weights.shape[0]
    return layers, out_layer


def target_network_forward(x, weights, out_ch, use_bias=True,
                           use_bf16_matmul=False):
    """x: (N, 3) float32; weights: flat (num_params,) float32. Returns (N, 3)."""
    assert x.ndim == 2 and x.shape[1] == 3, "TargetNetwork input must be (N, 3)"
    assert max(out_ch) <= PAD, f"out_ch widths must be <= {PAD} (got {out_ch})"
    N = x.shape[0]
    num_hidden = len(out_ch)
    compute_dtype = jnp.bfloat16 if use_bf16_matmul else jnp.float32

    layers, (w_out, b_out) = _split_flat_weights(weights, out_ch, use_bias)

    # Pre-transpose + zero-pad all params.  MXU-facing weights optionally bf16;
    # layer-1 (VPU) weights and all biases stay f32.
    w1, _ = layers[0]
    w1T_pad = _pad2(w1.T, 8, PAD)                                  # (8, PAD) f32
    wT_pads = [_pad2(w.T, PAD, PAD).astype(compute_dtype) for (w, _) in layers[1:]]
    wT_out_pad = _pad2(w_out.T, PAD, PAD).astype(compute_dtype)
    b_pads, b_out_pad = [], None
    if use_bias:
        b_pads = [_pad2(b[None, :], 1, PAD) for (_, b) in layers]
        b_out_pad = _pad2(b_out[None, :], 1, PAD)

    # Row tile: big enough to amortize the ~0.35us per-step pipeline overhead,
    # but chosen so the grid has >=2 steps for larger clouds so the "parallel"
    # axis can shard across both v7x TensorCores.
    half = -(-max(N, 1) // 2)                    # ceil(N / 2)
    tm = min(TM_MAX, _round_up(half, 256))
    n_pad = _round_up(N, tm)

    # Only row-pad x; features stay at width 3 (12 B/point of HBM read traffic).
    x_pad = jnp.zeros((n_pad, 3), jnp.float32).at[:N, :].set(x)

    grid = (n_pad // tm,)
    x_spec = pl.BlockSpec((tm, 3), lambda i: (i, 0))
    w1_spec = pl.BlockSpec((8, PAD), lambda i: (0, 0))
    w_spec = pl.BlockSpec((PAD, PAD), lambda i: (0, 0))
    b_spec = pl.BlockSpec((1, PAD), lambda i: (0, 0))
    o_spec = pl.BlockSpec((tm, 3), lambda i: (i, 0))

    in_specs = [x_spec, w1_spec] + [w_spec] * (num_hidden - 1) + [w_spec]
    operands = [x_pad, w1T_pad] + wT_pads + [wT_out_pad]
    if use_bias:
        in_specs += [b_spec] * num_hidden + [b_spec]
        operands += b_pads + [b_out_pad]

    kernel = functools.partial(_tn_kernel, num_hidden, use_bias, compute_dtype)

    out = pl.pallas_call(
        kernel,
        out_shape=jax.ShapeDtypeStruct((n_pad, 3), jnp.float32),
        grid_spec=pl.GridSpec(
            grid=grid,
            in_specs=in_specs,
            out_specs=o_spec,
        ),
        compiler_params=pltpu.CompilerParams(
            dimension_semantics=("parallel",),
            # TM=4096 footprint is ~15 MiB (double-buffered lane-padded x/out +
            # intermediates + resident weights); raise above v5e's 16 MiB
            # scoped default while staying well under v7x's 64 MiB physical.
            vmem_limit_bytes=48 * 1024 * 1024,
        ),
    )(*operands)

    return out[:N]


def _reference_forward(x, weights, out_ch, use_bias=True):
    hp = jax.lax.Precision.HIGHEST
    layers, (w_out, b_out) = _split_flat_weights(weights, out_ch, use_bias)
    h = x
    for (w, b) in layers:
        h = jnp.dot(h, w.T, precision=hp)
        if use_bias:
            h = h + b
        h = jax.nn.sigmoid(h)
    out = jnp.dot(h, w_out.T, precision=hp)
    if use_bias:
        out = out + b_out
    return out


if __name__ == "__main__":
    # Small config consistent with the module: per-point MLP 3 -> 32 -> 64 -> 32 -> 3.
    out_ch = [32, 64, 32]
    use_bias = True

    # Flat weight-vector length, exactly as TargetNetwork.__init__ consumes it.
    n_params = 0
    prev = 3
    for c in out_ch:
        n_params += c * prev + (c if use_bias else 0)
        prev = c
    n_params += 3 * out_ch[-1] + (3 if use_bias else 0)

    key = jax.random.PRNGKey(0)
    k_w, k_x = jax.random.split(key)
    weights = jax.random.normal(k_w, (n_params,), dtype=jnp.float32) * 0.5
    x = jax.random.normal(k_x, (256, 3), dtype=jnp.float32)   # 256 points, xyz

    out = target_network_forward(x, weights, out_ch, use_bias)
    out = jax.block_until_ready(out)

    ref = _reference_forward(x, weights, out_ch, use_bias)
    assert out.shape == (256, 3)
    assert jnp.allclose(out, ref, atol=1e-4, rtol=1e-4), "mismatch vs JAX reference"

    print("KERNEL_OK")
</pallas_src>

<mosaic_0001>
module attributes {stable_mosaic.version = 11 : i64} {
  func.func @_tn_kernel(%arg0: i32, %arg1: memref<256x3xf32, #tpu.memory_space<vmem>>, %arg2: memref<8x128xf32, #tpu.memory_space<vmem>>, %arg3: memref<128x128xf32, #tpu.memory_space<vmem>>, %arg4: memref<128x128xf32, #tpu.memory_space<vmem>>, %arg5: memref<128x128xf32, #tpu.memory_space<vmem>>, %arg6: memref<1x128xf32, #tpu.memory_space<vmem>>, %arg7: memref<1x128xf32, #tpu.memory_space<vmem>>, %arg8: memref<1x128xf32, #tpu.memory_space<vmem>>, %arg9: memref<1x128xf32, #tpu.memory_space<vmem>>, %arg10: memref<256x3xf32, #tpu.memory_space<vmem>>) attributes {dimension_semantics = [#tpu.dimension_semantics<parallel>], iteration_bounds = array<i64: 1>, scalar_prefetch = 0 : i64, scratch_operands = 0 : i64, tpu.core_type = #tpu.core_type<tc>, window_params = [{transform_indices = @transform_0, window_bounds = array<i64: 256, 3>}, {pipeline_mode = #tpu.pipeline_mode<synchronous>, transform_indices = @transform_1, window_bounds = array<i64: 8, 128>}, {pipeline_mode = #tpu.pipeline_mode<synchronous>, transform_indices = @transform_2, window_bounds = array<i64: 128, 128>}, {pipeline_mode = #tpu.pipeline_mode<synchronous>, transform_indices = @transform_3, window_bounds = array<i64: 128, 128>}, {pipeline_mode = #tpu.pipeline_mode<synchronous>, transform_indices = @transform_4, window_bounds = array<i64: 128, 128>}, {pipeline_mode = #tpu.pipeline_mode<synchronous>, transform_indices = @transform_5, window_bounds = array<i64: 1, 128>}, {pipeline_mode = #tpu.pipeline_mode<synchronous>, transform_indices = @transform_6, window_bounds = array<i64: 1, 128>}, {pipeline_mode = #tpu.pipeline_mode<synchronous>, transform_indices = @transform_7, window_bounds = array<i64: 1, 128>}, {pipeline_mode = #tpu.pipeline_mode<synchronous>, transform_indices = @transform_8, window_bounds = array<i64: 1, 128>}, {transform_indices = @transform_9, window_bounds = array<i64: 256, 3>}]} {
    %c0 = arith.constant 0 : index
    %c0_0 = arith.constant 0 : index
    %0 = vector.load %arg1[%c0, %c0_0] : memref<256x3xf32, #tpu.memory_space<vmem>>, vector<256x3xf32>
    %1 = vector.extract_strided_slice %0 {offsets = [0, 0], sizes = [256, 1], strides = [1, 1]} : vector<256x3xf32> to vector<256x1xf32>
    %c0_1 = arith.constant 0 : index
    %c0_2 = arith.constant 0 : index
    %2 = vector.load %arg2[%c0_1, %c0_2] : memref<8x128xf32, #tpu.memory_space<vmem>>, vector<1x128xf32>
    %3 = vector.broadcast %1 : vector<256x1xf32> to vector<256x128xf32>
    %4 = vector.broadcast %2 : vector<1x128xf32> to vector<256x128xf32>
    %5 = arith.mulf %3, %4 : vector<256x128xf32>
    %6 = vector.extract_strided_slice %0 {offsets = [0, 1], sizes = [256, 1], strides = [1, 1]} : vector<256x3xf32> to vector<256x1xf32>
    %c1 = arith.constant 1 : index
    %c0_3 = arith.constant 0 : index
    %7 = vector.load %arg2[%c1, %c0_3] : memref<8x128xf32, #tpu.memory_space<vmem>>, vector<1x128xf32>
    %8 = vector.broadcast %6 : vector<256x1xf32> to vector<256x128xf32>
    %9 = vector.broadcast %7 : vector<1x128xf32> to vector<256x128xf32>
    %10 = arith.mulf %8, %9 : vector<256x128xf32>
    %11 = arith.addf %5, %10 : vector<256x128xf32>
    %12 = vector.extract_strided_slice %0 {offsets = [0, 2], sizes = [256, 1], strides = [1, 1]} : vector<256x3xf32> to vector<256x1xf32>
    %c2 = arith.constant 2 : index
    %c0_4 = arith.constant 0 : index
    %13 = vector.load %arg2[%c2, %c0_4] : memref<8x128xf32, #tpu.memory_space<vmem>>, vector<1x128xf32>
    %14 = vector.broadcast %12 : vector<256x1xf32> to vector<256x128xf32>
    %15 = vector.broadcast %13 : vector<1x128xf32> to vector<256x128xf32>
    %16 = arith.mulf %14, %15 : vector<256x128xf32>
    %17 = arith.addf %11, %16 : vector<256x128xf32>
    %c0_5 = arith.constant 0 : index
    %c0_6 = arith.constant 0 : index
    %18 = vector.load %arg6[%c0_5, %c0_6] : memref<1x128xf32, #tpu.memory_space<vmem>>, vector<1x128xf32>
    %19 = vector.broadcast %18 : vector<1x128xf32> to vector<256x128xf32>
    %20 = arith.addf %17, %19 : vector<256x128xf32>
    %cst = arith.constant 5.000000e-01 : f32
    %21 = vector.broadcast %cst : f32 to vector<256x128xf32>
    %22 = arith.mulf %21, %20 : vector<256x128xf32>
    %23 = math.tanh %22 : vector<256x128xf32>
    %cst_7 = arith.constant 5.000000e-01 : f32
    %24 = vector.broadcast %cst_7 : f32 to vector<256x128xf32>
    %25 = arith.mulf %24, %23 : vector<256x128xf32>
    %cst_8 = arith.constant 5.000000e-01 : f32
    %26 = vector.broadcast %cst_8 : f32 to vector<256x128xf32>
    %27 = arith.addf %25, %26 : vector<256x128xf32>
    %c0_9 = arith.constant 0 : index
    %c0_10 = arith.constant 0 : index
    %28 = vector.load %arg3[%c0_9, %c0_10] : memref<128x128xf32, #tpu.memory_space<vmem>>, vector<128x128xf32>
    %cst_11 = arith.constant dense<0.000000e+00> : vector<256x128xf32>
    %29 = tpu.matmul %27, %28, %cst_11 {dimension_numbers = #tpu.dot_dimension_numbers<[1], [0], [0], [1], [0, 0, 1, 1], [], []>} : vector<256x128xf32>, vector<128x128xf32>, vector<256x128xf32> -> vector<256x128xf32>
    %c0_12 = arith.constant 0 : index
    %c0_13 = arith.constant 0 : index
    %30 = vector.load %arg7[%c0_12, %c0_13] : memref<1x128xf32, #tpu.memory_space<vmem>>, vector<1x128xf32>
    %31 = vector.broadcast %30 : vector<1x128xf32> to vector<256x128xf32>
    %32 = arith.addf %29, %31 : vector<256x128xf32>
    %cst_14 = arith.constant 5.000000e-01 : f32
    %33 = vector.broadcast %cst_14 : f32 to vector<256x128xf32>
    %34 = arith.mulf %33, %32 : vector<256x128xf32>
    %35 = math.tanh %34 : vector<256x128xf32>
    %cst_15 = arith.constant 5.000000e-01 : f32
    %36 = vector.broadcast %cst_15 : f32 to vector<256x128xf32>
    %37 = arith.mulf %36, %35 : vector<256x128xf32>
    %cst_16 = arith.constant 5.000000e-01 : f32
    %38 = vector.broadcast %cst_16 : f32 to vector<256x128xf32>
    %39 = arith.addf %37, %38 : vector<256x128xf32>
    %c0_17 = arith.constant 0 : index
    %c0_18 = arith.constant 0 : index
    %40 = vector.load %arg4[%c0_17, %c0_18] : memref<128x128xf32, #tpu.memory_space<vmem>>, vector<128x128xf32>
    %cst_19 = arith.constant dense<0.000000e+00> : vector<256x128xf32>
    %41 = tpu.matmul %39, %40, %cst_19 {dimension_numbers = #tpu.dot_dimension_numbers<[1], [0], [0], [1], [0, 0, 1, 1], [], []>} : vector<256x128xf32>, vector<128x128xf32>, vector<256x128xf32> -> vector<256x128xf32>
    %c0_20 = arith.constant 0 : index
    %c0_21 = arith.constant 0 : index
    %42 = vector.load %arg8[%c0_20, %c0_21] : memref<1x128xf32, #tpu.memory_space<vmem>>, vector<1x128xf32>
    %43 = vector.broadcast %42 : vector<1x128xf32> to vector<256x128xf32>
    %44 = arith.addf %41, %43 : vector<256x128xf32>
    %cst_22 = arith.constant 5.000000e-01 : f32
    %45 = vector.broadcast %cst_22 : f32 to vector<256x128xf32>
    %46 = arith.mulf %45, %44 : vector<256x128xf32>
    %47 = math.tanh %46 : vector<256x128xf32>
    %cst_23 = arith.constant 5.000000e-01 : f32
    %48 = vector.broadcast %cst_23 : f32 to vector<256x128xf32>
    %49 = arith.mulf %48, %47 : vector<256x128xf32>
    %cst_24 = arith.constant 5.000000e-01 : f32
    %50 = vector.broadcast %cst_24 : f32 to vector<256x128xf32>
    %51 = arith.addf %49, %50 : vector<256x128xf32>
    %c0_25 = arith.constant 0 : index
    %c0_26 = arith.constant 0 : index
    %52 = vector.load %arg5[%c0_25, %c0_26] : memref<128x128xf32, #tpu.memory_space<vmem>>, vector<128x128xf32>
    %cst_27 = arith.constant dense<0.000000e+00> : vector<256x128xf32>
    %53 = tpu.matmul %51, %52, %cst_27 {dimension_numbers = #tpu.dot_dimension_numbers<[1], [0], [0], [1], [0, 0, 1, 1], [], []>} : vector<256x128xf32>, vector<128x128xf32>, vector<256x128xf32> -> vector<256x128xf32>
    %c0_28 = arith.constant 0 : index
    %c0_29 = arith.constant 0 : index
    %54 = vector.load %arg9[%c0_28, %c0_29] : memref<1x128xf32, #tpu.memory_space<vmem>>, vector<1x128xf32>
    %55 = vector.broadcast %54 : vector<1x128xf32> to vector<256x128xf32>
    %56 = arith.addf %53, %55 : vector<256x128xf32>
    %57 = vector.extract_strided_slice %56 {offsets = [0, 0], sizes = [256, 3], strides = [1, 1]} : vector<256x128xf32> to vector<256x3xf32>
    %c0_30 = arith.constant 0 : index
    %c0_31 = arith.constant 0 : index
    %58 = vector.load %arg10[%c0_30, %c0_31] : memref<256x3xf32, #tpu.memory_space<vmem>>, vector<256x3xf32>
    tpu.vector_store %arg10[%c0_30, %c0_31], %57 {strides = array<i32>} : memref<256x3xf32, #tpu.memory_space<vmem>>, vector<256x3xf32>,
    return
  }
  func.func @transform_0(%arg0: i32) -> (i32, i32) {
    %c0_i32 = arith.constant 0 : i32
    %c0_i32_0 = arith.constant 0 : i32
    return %arg0, %c0_i32 : i32, i32
  }
  func.func @transform_1(%arg0: i32) -> (i32, i32) {
    %c0_i32 = arith.constant 0 : i32
    %c0_i32_0 = arith.constant 0 : i32
    %c0_i32_1 = arith.constant 0 : i32
    return %c0_i32, %c0_i32_0 : i32, i32
  }
  func.func @transform_2(%arg0: i32) -> (i32, i32) {
    %c0_i32 = arith.constant 0 : i32
    %c0_i32_0 = arith.constant 0 : i32
    %c0_i32_1 = arith.constant 0 : i32
    return %c0_i32, %c0_i32_0 : i32, i32
  }
  func.func @transform_3(%arg0: i32) -> (i32, i32) {
    %c0_i32 = arith.constant 0 : i32
    %c0_i32_0 = arith.constant 0 : i32
    %c0_i32_1 = arith.constant 0 : i32
    return %c0_i32, %c0_i32_0 : i32, i32
  }
  func.func @transform_4(%arg0: i32) -> (i32, i32) {
    %c0_i32 = arith.constant 0 : i32
    %c0_i32_0 = arith.constant 0 : i32
    %c0_i32_1 = arith.constant 0 : i32
    return %c0_i32, %c0_i32_0 : i32, i32
  }
  func.func @transform_5(%arg0: i32) -> (i32, i32) {
    %c0_i32 = arith.constant 0 : i32
    %c0_i32_0 = arith.constant 0 : i32
    %c0_i32_1 = arith.constant 0 : i32
    return %c0_i32, %c0_i32_0 : i32, i32
  }
  func.func @transform_6(%arg0: i32) -> (i32, i32) {
    %c0_i32 = arith.constant 0 : i32
    %c0_i32_0 = arith.constant 0 : i32
    %c0_i32_1 = arith.constant 0 : i32
    return %c0_i32, %c0_i32_0 : i32, i32
  }
  func.func @transform_7(%arg0: i32) -> (i32, i32) {
    %c0_i32 = arith.constant 0 : i32
    %c0_i32_0 = arith.constant 0 : i32
    %c0_i32_1 = arith.constant 0 : i32
    return %c0_i32, %c0_i32_0 : i32, i32
  }
  func.func @transform_8(%arg0: i32) -> (i32, i32) {
    %c0_i32 = arith.constant 0 : i32
    %c0_i32_0 = arith.constant 0 : i32
    %c0_i32_1 = arith.constant 0 : i32
    return %c0_i32, %c0_i32_0 : i32, i32
  }
  func.func @transform_9(%arg0: i32) -> (i32, i32) {
    %c0_i32 = arith.constant 0 : i32
    %c0_i32_0 = arith.constant 0 : i32
    return %arg0, %c0_i32 : i32, i32
  }
}

</mosaic_0001>

<llo_original>
// kernel: tpu_custom_call.1
$region0: #{tpu_custom_call.1}
  #allocation0 [shape = 'u32[]', space=smem, size = 0x4, offset = 0x4, fixed_abs, tag = 'smem constant byte address 0x4 - core index']
  #allocation1 [shape = 'u32[72,128]{1,0:T(1,128)}', space=vmem, size = 0x9000, scoped, tag = 'internal scratch']
  %s0 = inlined_call_operand.vmem [shape: f32[256,3], index: 0, kind: input, shape index: {}]
  %s1 = inlined_call_operand.vmem [shape: f32[8,128], index: 1, kind: input, shape index: {}]
  %s2 = inlined_call_operand.vmem [shape: f32[128,128], index: 2, kind: input, shape index: {}]
  %s3 = inlined_call_operand.vmem [shape: f32[128,128], index: 3, kind: input, shape index: {}]
  %s4 = inlined_call_operand.hbm [shape: f32[128,128], index: 4, kind: input, shape index: {}]
  %s5 = inlined_call_operand.vmem [shape: f32[1,128], index: 5, kind: input, shape index: {}]
  %s6 = inlined_call_operand.vmem [shape: f32[1,128], index: 6, kind: input, shape index: {}]
  %s7 = inlined_call_operand.vmem [shape: f32[1,128], index: 7, kind: input, shape index: {}]
  %s8 = inlined_call_operand.vmem [shape: f32[1,128], index: 8, kind: input, shape index: {}]
  %s9 = inlined_call_operand.vmem [shape: f32[256,3], index: 9, kind: output, shape index: {}]
  %s10 = sld [smem:[#allocation0]]
  $region50: #{tpu_custom_call.1} parent=0
    _
  %s12 = ssub.s32 1, %s10
  %s13 = scalar_select 0, %s12, %s10
  $region1: #{tpu_custom_call.1} parent=0
    #allocation2 [shape = 'u8[65536]{0}', space=vmem, size = 0x10000, scoped, tag = 'input window, operand 4, single buffered']
    #allocation3 [shape = 's32[1]{0}', space=sflag, size = 0x4, scoped, tag = 'scoped memory for tpu_custom_call.1']
    %14 = vsyncpa [#allocation3], 0
    // Predicated region
    $region2: #{tpu_custom_call.1} parent=1 // pred_check
      _
    $region3: #{tpu_custom_call.1} parent=1 // pred_check_branch
      %16 = sbr.rel (0) target = $region5
    $region4: #{tpu_custom_call.1} parent=1 // pred_region
      _
    $region5: #{tpu_custom_call.1} parent=1 // pred_fallthru
      _
    // Predicated region
    $region6: #{tpu_custom_call.1} parent=1 // pred_check
      _
    $region7: #{tpu_custom_call.1} parent=1 // pred_check_branch
      %18 = sbr.rel (0) target = $region9
    $region8: #{tpu_custom_call.1} parent=1 // pred_region
      _
    $region9: #{tpu_custom_call.1} parent=1 // pred_fallthru
      _
    // Predicated region
    $region10: #{tpu_custom_call.1} parent=1 // pred_check
      _
    $region11: #{tpu_custom_call.1} parent=1 // pred_check_branch
      %20 = sbr.rel (0) target = $region13
    $region12: #{tpu_custom_call.1} parent=1 // pred_region
      _
    $region13: #{tpu_custom_call.1} parent=1 // pred_fallthru
      _
    // Predicated region
    $region14: #{tpu_custom_call.1} parent=1 // pred_check
      _
    $region15: #{tpu_custom_call.1} parent=1 // pred_check_branch
      %22 = sbr.rel (0) target = $region17
    $region16: #{tpu_custom_call.1} parent=1 // pred_region
      _
    $region17: #{tpu_custom_call.1} parent=1 // pred_fallthru
      _
    // Predicated region
    $region18: #{tpu_custom_call.1} parent=1 // pred_check
      _
    $region19: #{tpu_custom_call.1} parent=1 // pred_check_branch
      %24 = sbr.rel (0) target = $region21
    $region20: #{tpu_custom_call.1} parent=1 // pred_region
      %26 = vsyncadd [#allocation3], 0
      %s27 = sshll.u32 %s4, 4
      %s28 = int_to_ptr.hbm [resolvable:$true] %s27
      %s29 = sshll.u32 [#allocation2], 4
      %s30 = int_to_ptr.vmem [resolvable:$true] %s29
      %35 = dma.hbm_to_vmem [thread:$0]  %s28, 2048, %s30, [#allocation3], 128, 128, 8
    $region21: #{tpu_custom_call.1} parent=1 // pred_fallthru
      _
    // Predicated region
    $region22: #{tpu_custom_call.1} parent=1 // pred_check
      _
    $region23: #{tpu_custom_call.1} parent=1 // pred_check_branch
      %37 = sbr.rel (0) target = $region25
    $region24: #{tpu_custom_call.1} parent=1 // pred_region
      _
    $region25: #{tpu_custom_call.1} parent=1 // pred_fallthru
      _
    // Predicated region
    $region26: #{tpu_custom_call.1} parent=1 // pred_check
      _
    $region27: #{tpu_custom_call.1} parent=1 // pred_check_branch
      %39 = sbr.rel (0) target = $region29
    $region28: #{tpu_custom_call.1} parent=1 // pred_region
      _
    $region29: #{tpu_custom_call.1} parent=1 // pred_fallthru
      _
    // Predicated region
    $region30: #{tpu_custom_call.1} parent=1 // pred_check
      _
    $region31: #{tpu_custom_call.1} parent=1 // pred_check_branch
      %41 = sbr.rel (0) target = $region33
    $region32: #{tpu_custom_call.1} parent=1 // pred_region
      _
    $region33: #{tpu_custom_call.1} parent=1 // pred_fallthru
      _
    // Predicated region
    $region34: #{tpu_custom_call.1} parent=1 // pred_check
      _
    $region35: #{tpu_custom_call.1} parent=1 // pred_check_branch
      %43 = sbr.rel (0) target = $region37
    $region36: #{tpu_custom_call.1} parent=1 // pred_region
      _
    $region37: #{tpu_custom_call.1} parent=1 // pred_fallthru
      _
    // Predicated region
    $region38: #{tpu_custom_call.1} parent=1 // pred_check
      _
    $region39: #{tpu_custom_call.1} parent=1 // pred_check_branch
      %45 = sbr.rel (0) target = $region41
    $region40: #{tpu_custom_call.1} parent=1 // pred_region
      %47 = dma.done [#allocation3], 2048
    $region41: #{tpu_custom_call.1} parent=1 // pred_fallthru
      _
    %v48 = vld [vmem:[%s0] sm:$0xff]
    %v49 = vld [vmem:[%s0 + $0x8] sm:$0xff]
    %v50 = vld [vmem:[%s0 + $0x10] sm:$0xff]
    %v51 = vld [vmem:[%s0 + $0x18] sm:$0xff]
    %v52 = vld [vmem:[%s0 + $0x20] sm:$0xff]
    %v53 = vld [vmem:[%s0 + $0x28] sm:$0xff]
    %v54 = vld [vmem:[%s0 + $0x30] sm:$0xff]
    %v55 = vld [vmem:[%s0 + $0x38] sm:$0xff]
    %v56 = vld [vmem:[%s0 + $0x40] sm:$0xff]
    %v57 = vld [vmem:[%s0 + $0x48] sm:$0xff]
    %v58 = vld [vmem:[%s0 + $0x50] sm:$0xff]
    %v59 = vld [vmem:[%s0 + $0x58] sm:$0xff]
    %v60 = vld [vmem:[%s0 + $0x60] sm:$0xff]
    %v61 = vld [vmem:[%s0 + $0x68] sm:$0xff]
    %v62 = vld [vmem:[%s0 + $0x70] sm:$0xff]
    %v63 = vld [vmem:[%s0 + $0x78] sm:$0xff]
    %v64 = vld [vmem:[%s0 + $0x80] sm:$0xff]
    %v65 = vld [vmem:[%s0 + $0x88] sm:$0xff]
    %v66 = vld [vmem:[%s0 + $0x90] sm:$0xff]
    %v67 = vld [vmem:[%s0 + $0x98] sm:$0xff]
    %v68 = vld [vmem:[%s0 + $0xa0] sm:$0xff]
    %v69 = vld [vmem:[%s0 + $0xa8] sm:$0xff]
    %v70 = vld [vmem:[%s0 + $0xb0] sm:$0xff]
    %v71 = vld [vmem:[%s0 + $0xb8] sm:$0xff]
    %v72 = vld [vmem:[%s0 + $0xc0] sm:$0xff]
    %v73 = vld [vmem:[%s0 + $0xc8] sm:$0xff]
    %v74 = vld [vmem:[%s0 + $0xd0] sm:$0xff]
    %v75 = vld [vmem:[%s0 + $0xd8] sm:$0xff]
    %v76 = vld [vmem:[%s0 + $0xe0] sm:$0xff]
    %v77 = vld [vmem:[%s0 + $0xe8] sm:$0xff]
    %v78 = vld [vmem:[%s0 + $0xf0] sm:$0xff]
    %v79 = vld [vmem:[%s0 + $0xf8] sm:$0xff]
    %v80 = vld [vmem:[%s1] sm:$0x1]
    %82 = vset.pattern.permute.xlu0 0
    %83 = vperm.xlu0 %82, %v48
    %v84 = vpop.permute.xlu0 %83
    %87 = vset.pattern.permute.xlu0 0
    %88 = vperm.xlu0 %87, %v49
    %v89 = vpop.permute.xlu0 %88
    %92 = vset.pattern.permute.xlu0 0
    %93 = vperm.xlu0 %92, %v50
    %v94 = vpop.permute.xlu0 %93
    %97 = vset.pattern.permute.xlu0 0
    %98 = vperm.xlu0 %97, %v51
    %v99 = vpop.permute.xlu0 %98
    %102 = vset.pattern.permute.xlu0 0
    %103 = vperm.xlu0 %102, %v52
    %v104 = vpop.permute.xlu0 %103
    %107 = vset.pattern.permute.xlu0 0
    %108 = vperm.xlu0 %107, %v53
    %v109 = vpop.permute.xlu0 %108
    %112 = vset.pattern.permute.xlu0 0
    %113 = vperm.xlu0 %112, %v54
    %v114 = vpop.permute.xlu0 %113
    %117 = vset.pattern.permute.xlu0 0
    %118 = vperm.xlu0 %117, %v55
    %v119 = vpop.permute.xlu0 %118
    %122 = vset.pattern.permute.xlu0 0
    %123 = vperm.xlu0 %122, %v56
    %v124 = vpop.permute.xlu0 %123
    %127 = vset.pattern.permute.xlu0 0
    %128 = vperm.xlu0 %127, %v57
    %v129 = vpop.permute.xlu0 %128
    %132 = vset.pattern.permute.xlu0 0
    %133 = vperm.xlu0 %132, %v58
    %v134 = vpop.permute.xlu0 %133
    %137 = vset.pattern.permute.xlu0 0
    %138 = vperm.xlu0 %137, %v59
    %v139 = vpop.permute.xlu0 %138
    %142 = vset.pattern.permute.xlu0 0
    %143 = vperm.xlu0 %142, %v60
    %v144 = vpop.permute.xlu0 %143
    %147 = vset.pattern.permute.xlu0 0
    %148 = vperm.xlu0 %147, %v61
    %v149 = vpop.permute.xlu0 %148
    %152 = vset.pattern.permute.xlu0 0
    %153 = vperm.xlu0 %152, %v62
    %v154 = vpop.permute.xlu0 %153
    %157 = vset.pattern.permute.xlu0 0
    %158 = vperm.xlu0 %157, %v63
    %v159 = vpop.permute.xlu0 %158
    %162 = vset.pattern.permute.xlu0 0
    %163 = vperm.xlu0 %162, %v64
    %v164 = vpop.permute.xlu0 %163
    %167 = vset.pattern.permute.xlu0 0
    %168 = vperm.xlu0 %167, %v65
    %v169 = vpop.permute.xlu0 %168
    %172 = vset.pattern.permute.xlu0 0
    %173 = vperm.xlu0 %172, %v66
    %v174 = vpop.permute.xlu0 %173
    %177 = vset.pattern.permute.xlu0 0
    %178 = vperm.xlu0 %177, %v67
    %v179 = vpop.permute.xlu0 %178
    %182 = vset.pattern.permute.xlu0 0
    %183 = vperm.xlu0 %182, %v68
    %v184 = vpop.permute.xlu0 %183
    %187 = vset.pattern.permute.xlu0 0
    %188 = vperm.xlu0 %187, %v69
    %v189 = vpop.permute.xlu0 %188
    %192 = vset.pattern.permute.xlu0 0
    %193 = vperm.xlu0 %192, %v70
    %v194 = vpop.permute.xlu0 %193
    %197 = vset.pattern.permute.xlu0 0
    %198 = vperm.xlu0 %197, %v71
    %v199 = vpop.permute.xlu0 %198
    %202 = vset.pattern.permute.xlu0 0
    %203 = vperm.xlu0 %202, %v72
    %v204 = vpop.permute.xlu0 %203
    %207 = vset.pattern.permute.xlu0 0
    %208 = vperm.xlu0 %207, %v73
    %v209 = vpop.permute.xlu0 %208
    %212 = vset.pattern.permute.xlu0 0
    %213 = vperm.xlu0 %212, %v74
    %v214 = vpop.permute.xlu0 %213
    %217 = vset.pattern.permute.xlu0 0
    %218 = vperm.xlu0 %217, %v75
    %v219 = vpop.permute.xlu0 %218
    %222 = vset.pattern.permute.xlu0 0
    %223 = vperm.xlu0 %222, %v76
    %v224 = vpop.permute.xlu0 %223
    %227 = vset.pattern.permute.xlu0 0
    %228 = vperm.xlu0 %227, %v77
    %v229 = vpop.permute.xlu0 %228
    %232 = vset.pattern.permute.xlu0 0
    %233 = vperm.xlu0 %232, %v78
    %v234 = vpop.permute.xlu0 %233
    %237 = vset.pattern.permute.xlu0 0
    %238 = vperm.xlu0 %237, %v79
    %v239 = vpop.permute.xlu0 %238
    %v241 = vperm.slane %v80, 0
    %v242 = vmul.f32 %v84, %v241
    %v243 = vmul.f32 %v89, %v241
    %v244 = vmul.f32 %v94, %v241
    %v245 = vmul.f32 %v99, %v241
    %v246 = vmul.f32 %v104, %v241
    %v247 = vmul.f32 %v109, %v241
    %v248 = vmul.f32 %v114, %v241
    %v249 = vmul.f32 %v119, %v241
    %v250 = vmul.f32 %v124, %v241
    %v251 = vmul.f32 %v129, %v241
    %v252 = vmul.f32 %v134, %v241
    %v253 = vmul.f32 %v139, %v241
    %v254 = vmul.f32 %v144, %v241
    %v255 = vmul.f32 %v149, %v241
    %v256 = vmul.f32 %v154, %v241
    %v257 = vmul.f32 %v159, %v241
    %v258 = vmul.f32 %v164, %v241
    %v259 = vmul.f32 %v169, %v241
    %v260 = vmul.f32 %v174, %v241
    %v261 = vmul.f32 %v179, %v241
    %v262 = vmul.f32 %v184, %v241
    %v263 = vmul.f32 %v189, %v241
    %v264 = vmul.f32 %v194, %v241
    %v265 = vmul.f32 %v199, %v241
    %v266 = vmul.f32 %v204, %v241
    %v267 = vmul.f32 %v209, %v241
    %v268 = vmul.f32 %v214, %v241
    %v269 = vmul.f32 %v219, %v241
    %v270 = vmul.f32 %v224, %v241
    %v271 = vmul.f32 %v229, %v241
    %v272 = vmul.f32 %v234, %v241
    %v273 = vmul.f32 %v239, %v241
    %v274 = vld [vmem:[%s1 + $0x1] sm:$0x1]
    %275 = vset.pattern.permute.xlu0 1
    %276 = vperm.xlu0 %275, %v48
    %v277 = vpop.permute.xlu0 %276
    %279 = vset.pattern.permute.xlu0 1
    %280 = vperm.xlu0 %279, %v49
    %v281 = vpop.permute.xlu0 %280
    %283 = vset.pattern.permute.xlu0 1
    %284 = vperm.xlu0 %283, %v50
    %v285 = vpop.permute.xlu0 %284
    %287 = vset.pattern.permute.xlu0 1
    %288 = vperm.xlu0 %287, %v51
    %v289 = vpop.permute.xlu0 %288
    %291 = vset.pattern.permute.xlu0 1
    %292 = vperm.xlu0 %291, %v52
    %v293 = vpop.permute.xlu0 %292
    %295 = vset.pattern.permute.xlu0 1
    %296 = vperm.xlu0 %295, %v53
    %v297 = vpop.permute.xlu0 %296
    %299 = vset.pattern.permute.xlu0 1
    %300 = vperm.xlu0 %299, %v54
    %v301 = vpop.permute.xlu0 %300
    %303 = vset.pattern.permute.xlu0 1
    %304 = vperm.xlu0 %303, %v55
    %v305 = vpop.permute.xlu0 %304
    %307 = vset.pattern.permute.xlu0 1
    %308 = vperm.xlu0 %307, %v56
    %v309 = vpop.permute.xlu0 %308
    %311 = vset.pattern.permute.xlu0 1
    %312 = vperm.xlu0 %311, %v57
    %v313 = vpop.permute.xlu0 %312
    %315 = vset.pattern.permute.xlu0 1
    %316 = vperm.xlu0 %315, %v58
    %v317 = vpop.permute.xlu0 %316
    %319 = vset.pattern.permute.xlu0 1
    %320 = vperm.xlu0 %319, %v59
    %v321 = vpop.permute.xlu0 %320
    %323 = vset.pattern.permute.xlu0 1
    %324 = vperm.xlu0 %323, %v60
    %v325 = vpop.permute.xlu0 %324
    %327 = vset.pattern.permute.xlu0 1
    %328 = vperm.xlu0 %327, %v61
    %v329 = vpop.permute.xlu0 %328
    %331 = vset.pattern.permute.xlu0 1
    %332 = vperm.xlu0 %331, %v62
    %v333 = vpop.permute.xlu0 %332
    %335 = vset.pattern.permute.xlu0 1
    %336 = vperm.xlu0 %335, %v63
    %v337 = vpop.permute.xlu0 %336
    %339 = vset.pattern.permute.xlu0 1
    %340 = vperm.xlu0 %339, %v64
    %v341 = vpop.permute.xlu0 %340
    %343 = vset.pattern.permute.xlu0 1
    %344 = vperm.xlu0 %343, %v65
    %v345 = vpop.permute.xlu0 %344
    %347 = vset.pattern.permute.xlu0 1
    %348 = vperm.xlu0 %347, %v66
    %v349 = vpop.permute.xlu0 %348
    %351 = vset.pattern.permute.xlu0 1
    %352 = vperm.xlu0 %351, %v67
    %v353 = vpop.permute.xlu0 %352
    %355 = vset.pattern.permute.xlu0 1
    %356 = vperm.xlu0 %355, %v68
    %v357 = vpop.permute.xlu0 %356
    %359 = vset.pattern.permute.xlu0 1
    %360 = vperm.xlu0 %359, %v69
    %v361 = vpop.permute.xlu0 %360
    %363 = vset.pattern.permute.xlu0 1
    %364 = vperm.xlu0 %363, %v70
    %v365 = vpop.permute.xlu0 %364
    %367 = vset.pattern.permute.xlu0 1
    %368 = vperm.xlu0 %367, %v71
    %v369 = vpop.permute.xlu0 %368
    %371 = vset.pattern.permute.xlu0 1
    %372 = vperm.xlu0 %371, %v72
    %v373 = vpop.permute.xlu0 %372
    %375 = vset.pattern.permute.xlu0 1
    %376 = vperm.xlu0 %375, %v73
    %v377 = vpop.permute.xlu0 %376
    %379 = vset.pattern.permute.xlu0 1
    %380 = vperm.xlu0 %379, %v74
    %v381 = vpop.permute.xlu0 %380
    %383 = vset.pattern.permute.xlu0 1
    %384 = vperm.xlu0 %383, %v75
    %v385 = vpop.permute.xlu0 %384
    %387 = vset.pattern.permute.xlu0 1
    %388 = vperm.xlu0 %387, %v76
    %v389 = vpop.permute.xlu0 %388
    %391 = vset.pattern.permute.xlu0 1
    %392 = vperm.xlu0 %391, %v77
    %v393 = vpop.permute.xlu0 %392
    %395 = vset.pattern.permute.xlu0 1
    %396 = vperm.xlu0 %395, %v78
    %v397 = vpop.permute.xlu0 %396
    %399 = vset.pattern.permute.xlu0 1
    %400 = vperm.xlu0 %399, %v79
    %v401 = vpop.permute.xlu0 %400
    %v403 = vperm.slane %v274, 0
    %v404 = vmul.f32 %v277, %v403
    %v405 = vmul.f32 %v281, %v403
    %v406 = vmul.f32 %v285, %v403
    %v407 = vmul.f32 %v289, %v403
    %v408 = vmul.f32 %v293, %v403
    %v409 = vmul.f32 %v297, %v403
    %v410 = vmul.f32 %v301, %v403
    %v411 = vmul.f32 %v305, %v403
    %v412 = vmul.f32 %v309, %v403
    %v413 = vmul.f32 %v313, %v403
    %v414 = vmul.f32 %v317, %v403
    %v415 = vmul.f32 %v321, %v403
    %v416 = vmul.f32 %v325, %v403
    %v417 = vmul.f32 %v329, %v403
    %v418 = vmul.f32 %v333, %v403
    %v419 = vmul.f32 %v337, %v403
    %v420 = vmul.f32 %v341, %v403
    %v421 = vmul.f32 %v345, %v403
    %v422 = vmul.f32 %v349, %v403
    %v423 = vmul.f32 %v353, %v403
    %v424 = vmul.f32 %v357, %v403
    %v425 = vmul.f32 %v361, %v403
    %v426 = vmul.f32 %v365, %v403
    %v427 = vmul.f32 %v369, %v403
    %v428 = vmul.f32 %v373, %v403
    %v429 = vmul.f32 %v377, %v403
    %v430 = vmul.f32 %v381, %v403
    %v431 = vmul.f32 %v385, %v403
    %v432 = vmul.f32 %v389, %v403
    %v433 = vmul.f32 %v393, %v403
    %v434 = vmul.f32 %v397, %v403
    %v435 = vmul.f32 %v401, %v403
    %v436 = vadd.f32 %v242, %v404
    %v437 = vadd.f32 %v243, %v405
    %v438 = vadd.f32 %v244, %v406
    %v439 = vadd.f32 %v245, %v407
    %v440 = vadd.f32 %v246, %v408
    %v441 = vadd.f32 %v247, %v409
    %v442 = vadd.f32 %v248, %v410
    %v443 = vadd.f32 %v249, %v411
    %v444 = vadd.f32 %v250, %v412
    %v445 = vadd.f32 %v251, %v413
    %v446 = vadd.f32 %v252, %v414
    %v447 = vadd.f32 %v253, %v415
    %v448 = vadd.f32 %v254, %v416
    %v449 = vadd.f32 %v255, %v417
    %v450 = vadd.f32 %v256, %v418
    %v451 = vadd.f32 %v257, %v419
    %v452 = vadd.f32 %v258, %v420
    %v453 = vadd.f32 %v259, %v421
    %v454 = vadd.f32 %v260, %v422
    %v455 = vadd.f32 %v261, %v423
    %v456 = vadd.f32 %v262, %v424
    %v457 = vadd.f32 %v263, %v425
    %v458 = vadd.f32 %v264, %v426
    %v459 = vadd.f32 %v265, %v427
    %v460 = vadd.f32 %v266, %v428
    %v461 = vadd.f32 %v267, %v429
    %v462 = vadd.f32 %v268, %v430
    %v463 = vadd.f32 %v269, %v431
    %v464 = vadd.f32 %v270, %v432
    %v465 = vadd.f32 %v271, %v433
    %v466 = vadd.f32 %v272, %v434
    %v467 = vadd.f32 %v273, %v435
    %v468 = vld [vmem:[%s1 + $0x2] sm:$0x1]
    %469 = vset.pattern.permute.xlu0 2
    %470 = vperm.xlu0 %469, %v48
    %v471 = vpop.permute.xlu0 %470
    %473 = vset.pattern.permute.xlu0 2
    %474 = vperm.xlu0 %473, %v49
    %v475 = vpop.permute.xlu0 %474
    %477 = vset.pattern.permute.xlu0 2
    %478 = vperm.xlu0 %477, %v50
    %v479 = vpop.permute.xlu0 %478
    %481 = vset.pattern.permute.xlu0 2
    %482 = vperm.xlu0 %481, %v51
    %v483 = vpop.permute.xlu0 %482
    %485 = vset.pattern.permute.xlu0 2
    %486 = vperm.xlu0 %485, %v52
    %v487 = vpop.permute.xlu0 %486
    %489 = vset.pattern.permute.xlu0 2
    %490 = vperm.xlu0 %489, %v53
    %v491 = vpop.permute.xlu0 %490
    %493 = vset.pattern.permute.xlu0 2
    %494 = vperm.xlu0 %493, %v54
    %v495 = vpop.permute.xlu0 %494
    %497 = vset.pattern.permute.xlu0 2
    %498 = vperm.xlu0 %497, %v55
    %v499 = vpop.permute.xlu0 %498
    %501 = vset.pattern.permute.xlu0 2
    %502 = vperm.xlu0 %501, %v56
    %v503 = vpop.permute.xlu0 %502
    %505 = vset.pattern.permute.xlu0 2
    %506 = vperm.xlu0 %505, %v57
    %v507 = vpop.permute.xlu0 %506
    %509 = vset.pattern.permute.xlu0 2
    %510 = vperm.xlu0 %509, %v58
    %v511 = vpop.permute.xlu0 %510
    %513 = vset.pattern.permute.xlu0 2
    %514 = vperm.xlu0 %513, %v59
    %v515 = vpop.permute.xlu0 %514
    %517 = vset.pattern.permute.xlu0 2
    %518 = vperm.xlu0 %517, %v60
    %v519 = vpop.permute.xlu0 %518
    %521 = vset.pattern.permute.xlu0 2
    %522 = vperm.xlu0 %521, %v61
    %v523 = vpop.permute.xlu0 %522
    %525 = vset.pattern.permute.xlu0 2
    %526 = vperm.xlu0 %525, %v62
    %v527 = vpop.permute.xlu0 %526
    %529 = vset.pattern.permute.xlu0 2
    %530 = vperm.xlu0 %529, %v63
    %v531 = vpop.permute.xlu0 %530
    %533 = vset.pattern.permute.xlu0 2
    %534 = vperm.xlu0 %533, %v64
    %v535 = vpop.permute.xlu0 %534
    %537 = vset.pattern.permute.xlu0 2
    %538 = vperm.xlu0 %537, %v65
    %v539 = vpop.permute.xlu0 %538
    %541 = vset.pattern.permute.xlu0 2
    %542 = vperm.xlu0 %541, %v66
    %v543 = vpop.permute.xlu0 %542
    %545 = vset.pattern.permute.xlu0 2
    %546 = vperm.xlu0 %545, %v67
    %v547 = vpop.permute.xlu0 %546
    %549 = vset.pattern.permute.xlu0 2
    %550 = vperm.xlu0 %549, %v68
    %v551 = vpop.permute.xlu0 %550
    %553 = vset.pattern.permute.xlu0 2
    %554 = vperm.xlu0 %553, %v69
    %v555 = vpop.permute.xlu0 %554
    %557 = vset.pattern.permute.xlu0 2
    %558 = vperm.xlu0 %557, %v70
    %v559 = vpop.permute.xlu0 %558
    %561 = vset.pattern.permute.xlu0 2
    %562 = vperm.xlu0 %561, %v71
    %v563 = vpop.permute.xlu0 %562
    %565 = vset.pattern.permute.xlu0 2
    %566 = vperm.xlu0 %565, %v72
    %v567 = vpop.permute.xlu0 %566
    %569 = vset.pattern.permute.xlu0 2
    %570 = vperm.xlu0 %569, %v73
    %v571 = vpop.permute.xlu0 %570
    %573 = vset.pattern.permute.xlu0 2
    %574 = vperm.xlu0 %573, %v74
    %v575 = vpop.permute.xlu0 %574
    %577 = vset.pattern.permute.xlu0 2
    %578 = vperm.xlu0 %577, %v75
    %v579 = vpop.permute.xlu0 %578
    %581 = vset.pattern.permute.xlu0 2
    %582 = vperm.xlu0 %581, %v76
    %v583 = vpop.permute.xlu0 %582
    %585 = vset.pattern.permute.xlu0 2
    %586 = vperm.xlu0 %585, %v77
    %v587 = vpop.permute.xlu0 %586
    %589 = vset.pattern.permute.xlu0 2
    %590 = vperm.xlu0 %589, %v78
    %v591 = vpop.permute.xlu0 %590
    %593 = vset.pattern.permute.xlu0 2
    %594 = vperm.xlu0 %593, %v79
    %v595 = vpop.permute.xlu0 %594
    %v597 = vperm.slane %v468, 0
    %v598 = vmul.f32 %v471, %v597
    %v599 = vmul.f32 %v475, %v597
    %v600 = vmul.f32 %v479, %v597
    %v601 = vmul.f32 %v483, %v597
    %v602 = vmul.f32 %v487, %v597
    %v603 = vmul.f32 %v491, %v597
    %v604 = vmul.f32 %v495, %v597
    %v605 = vmul.f32 %v499, %v597
    %v606 = vmul.f32 %v503, %v597
    %v607 = vmul.f32 %v507, %v597
    %v608 = vmul.f32 %v511, %v597
    %v609 = vmul.f32 %v515, %v597
    %v610 = vmul.f32 %v519, %v597
    %v611 = vmul.f32 %v523, %v597
    %v612 = vmul.f32 %v527, %v597
    %v613 = vmul.f32 %v531, %v597
    %v614 = vmul.f32 %v535, %v597
    %v615 = vmul.f32 %v539, %v597
    %v616 = vmul.f32 %v543, %v597
    %v617 = vmul.f32 %v547, %v597
    %v618 = vmul.f32 %v551, %v597
    %v619 = vmul.f32 %v555, %v597
    %v620 = vmul.f32 %v559, %v597
    %v621 = vmul.f32 %v563, %v597
    %v622 = vmul.f32 %v567, %v597
    %v623 = vmul.f32 %v571, %v597
    %v624 = vmul.f32 %v575, %v597
    %v625 = vmul.f32 %v579, %v597
    %v626 = vmul.f32 %v583, %v597
    %v627 = vmul.f32 %v587, %v597
    %v628 = vmul.f32 %v591, %v597
    %v629 = vmul.f32 %v595, %v597
    %v630 = vadd.f32 %v436, %v598
    %v631 = vadd.f32 %v437, %v599
    %v632 = vadd.f32 %v438, %v600
    %v633 = vadd.f32 %v439, %v601
    %v634 = vadd.f32 %v440, %v602
    %v635 = vadd.f32 %v441, %v603
    %v636 = vadd.f32 %v442, %v604
    %v637 = vadd.f32 %v443, %v605
    %v638 = vadd.f32 %v444, %v606
    %v639 = vadd.f32 %v445, %v607
    %v640 = vadd.f32 %v446, %v608
    %v641 = vadd.f32 %v447, %v609
    %v642 = vadd.f32 %v448, %v610
    %v643 = vadd.f32 %v449, %v611
    %v644 = vadd.f32 %v450, %v612
    %v645 = vadd.f32 %v451, %v613
    %v646 = vadd.f32 %v452, %v614
    %v647 = vadd.f32 %v453, %v615
    %v648 = vadd.f32 %v454, %v616
    %v649 = vadd.f32 %v455, %v617
    %v650 = vadd.f32 %v456, %v618
    %v651 = vadd.f32 %v457, %v619
    %v652 = vadd.f32 %v458, %v620
    %v653 = vadd.f32 %v459, %v621
    %v654 = vadd.f32 %v460, %v622
    %v655 = vadd.f32 %v461, %v623
    %v656 = vadd.f32 %v462, %v624
    %v657 = vadd.f32 %v463, %v625
    %v658 = vadd.f32 %v464, %v626
    %v659 = vadd.f32 %v465, %v627
    %v660 = vadd.f32 %v466, %v628
    %v661 = vadd.f32 %v467, %v629
    %v662 = vld [vmem:[%s5] sm:$0x1]
    %v664 = vperm.slane %v662, 0
    %v666 = vadd.f32 %v630, %v664
    %v667 = vadd.f32 %v631, %v664
    %v668 = vadd.f32 %v632, %v664
    %v669 = vadd.f32 %v633, %v664
    %v670 = vadd.f32 %v634, %v664
    %v671 = vadd.f32 %v635, %v664
    %v672 = vadd.f32 %v636, %v664
    %v673 = vadd.f32 %v637, %v664
    %v674 = vadd.f32 %v638, %v664
    %v675 = vadd.f32 %v639, %v664
    %v676 = vadd.f32 %v640, %v664
    %v677 = vadd.f32 %v641, %v664
    %v678 = vadd.f32 %v642, %v664
    %v679 = vadd.f32 %v643, %v664
    %v680 = vadd.f32 %v644, %v664
    %v681 = vadd.f32 %v645, %v664
    %v682 = vadd.f32 %v646, %v664
    %v683 = vadd.f32 %v647, %v664
    %v684 = vadd.f32 %v648, %v664
    %v685 = vadd.f32 %v649, %v664
    %v686 = vadd.f32 %v650, %v664
    %v687 = vadd.f32 %v651, %v664
    %v688 = vadd.f32 %v652, %v664
    %v689 = vadd.f32 %v653, %v664
    %v690 = vadd.f32 %v654, %v664
    %v691 = vadd.f32 %v655, %v664
    %v692 = vadd.f32 %v656, %v664
    %v693 = vadd.f32 %v657, %v664
    %v694 = vadd.f32 %v658, %v664
    %v695 = vadd.f32 %v659, %v664
    %v696 = vadd.f32 %v660, %v664
    %v697 = vadd.f32 %v661, %v664
    %v698 = vmul.f32 %v666, 0.5
    %v699 = vmul.f32 %v667, 0.5
    %v700 = vmul.f32 %v668, 0.5
    %v701 = vmul.f32 %v669, 0.5
    %v702 = vmul.f32 %v670, 0.5
    %v703 = vmul.f32 %v671, 0.5
    %v704 = vmul.f32 %v672, 0.5
    %v705 = vmul.f32 %v673, 0.5
    %v706 = vmul.f32 %v674, 0.5
    %v707 = vmul.f32 %v675, 0.5
    %v708 = vmul.f32 %v676, 0.5
    %v709 = vmul.f32 %v677, 0.5
    %v710 = vmul.f32 %v678, 0.5
    %v711 = vmul.f32 %v679, 0.5
    %v712 = vmul.f32 %v680, 0.5
    %v713 = vmul.f32 %v681, 0.5
    %v714 = vmul.f32 %v682, 0.5
    %v715 = vmul.f32 %v683, 0.5
    %v716 = vmul.f32 %v684, 0.5
    %v717 = vmul.f32 %v685, 0.5
    %v718 = vmul.f32 %v686, 0.5
    %v719 = vmul.f32 %v687, 0.5
    %v720 = vmul.f32 %v688, 0.5
    %v721 = vmul.f32 %v689, 0.5
    %v722 = vmul.f32 %v690, 0.5
    %v723 = vmul.f32 %v691, 0.5
    %v724 = vmul.f32 %v692, 0.5
    %v725 = vmul.f32 %v693, 0.5
    %v726 = vmul.f32 %v694, 0.5
    %v727 = vmul.f32 %v695, 0.5
    %v728 = vmul.f32 %v696, 0.5
    %v729 = vmul.f32 %v697, 0.5
    %v730 = vtanh.pop %v698
    %v731 = vtanh.pop %v699
    %v732 = vtanh.pop %v700
    %v733 = vtanh.pop %v701
    %v734 = vtanh.pop %v702
    %v735 = vtanh.pop %v703
    %v736 = vtanh.pop %v704
    %v737 = vtanh.pop %v705
    %v738 = vtanh.pop %v706
    %v739 = vtanh.pop %v707
    %v740 = vtanh.pop %v708
    %v741 = vtanh.pop %v709
    %v742 = vtanh.pop %v710
    %v743 = vtanh.pop %v711
    %v744 = vtanh.pop %v712
    %v745 = vtanh.pop %v713
    %v746 = vtanh.pop %v714
    %v747 = vtanh.pop %v715
    %v748 = vtanh.pop %v716
    %v749 = vtanh.pop %v717
    %v750 = vtanh.pop %v718
    %v751 = vtanh.pop %v719
    %v752 = vtanh.pop %v720
    %v753 = vtanh.pop %v721
    %v754 = vtanh.pop %v722
    %v755 = vtanh.pop %v723
    %v756 = vtanh.pop %v724
    %v757 = vtanh.pop %v725
    %v758 = vtanh.pop %v726
    %v759 = vtanh.pop %v727
    %v760 = vtanh.pop %v728
    %v761 = vtanh.pop %v729
    %v762 = vmul.f32 %v730, 0.5
    %v763 = vmul.f32 %v731, 0.5
    %v764 = vmul.f32 %v732, 0.5
    %v765 = vmul.f32 %v733, 0.5
    %v766 = vmul.f32 %v734, 0.5
    %v767 = vmul.f32 %v735, 0.5
    %v768 = vmul.f32 %v736, 0.5
    %v769 = vmul.f32 %v737, 0.5
    %v770 = vmul.f32 %v738, 0.5
    %v771 = vmul.f32 %v739, 0.5
    %v772 = vmul.f32 %v740, 0.5
    %v773 = vmul.f32 %v741, 0.5
    %v774 = vmul.f32 %v742, 0.5
    %v775 = vmul.f32 %v743, 0.5
    %v776 = vmul.f32 %v744, 0.5
    %v777 = vmul.f32 %v745, 0.5
    %v778 = vmul.f32 %v746, 0.5
    %v779 = vmul.f32 %v747, 0.5
    %v780 = vmul.f32 %v748, 0.5
    %v781 = vmul.f32 %v749, 0.5
    %v782 = vmul.f32 %v750, 0.5
    %v783 = vmul.f32 %v751, 0.5
    %v784 = vmul.f32 %v752, 0.5
    %v785 = vmul.f32 %v753, 0.5
    %v786 = vmul.f32 %v754, 0.5
    %v787 = vmul.f32 %v755, 0.5
    %v788 = vmul.f32 %v756, 0.5
    %v789 = vmul.f32 %v757, 0.5
    %v790 = vmul.f32 %v758, 0.5
    %v791 = vmul.f32 %v759, 0.5
    %v792 = vmul.f32 %v760, 0.5
    %v793 = vmul.f32 %v761, 0.5
    %v794 = vadd.f32 %v762, 0.5
    %v795 = vadd.f32 %v763, 0.5
    %v796 = vadd.f32 %v764, 0.5
    %v797 = vadd.f32 %v765, 0.5
    %v798 = vadd.f32 %v766, 0.5
    %v799 = vadd.f32 %v767, 0.5
    %v800 = vadd.f32 %v768, 0.5
    %v801 = vadd.f32 %v769, 0.5
    %v802 = vadd.f32 %v770, 0.5
    %v803 = vadd.f32 %v771, 0.5
    %v804 = vadd.f32 %v772, 0.5
    %v805 = vadd.f32 %v773, 0.5
    %v806 = vadd.f32 %v774, 0.5
    %v807 = vadd.f32 %v775, 0.5
    %v808 = vadd.f32 %v776, 0.5
    %v809 = vadd.f32 %v777, 0.5
    %v810 = vadd.f32 %v778, 0.5
    %v811 = vadd.f32 %v779, 0.5
    %v812 = vadd.f32 %v780, 0.5
    %v813 = vadd.f32 %v781, 0.5
    %v814 = vadd.f32 %v782, 0.5
    %v815 = vadd.f32 %v783, 0.5
    %v816 = vadd.f32 %v784, 0.5
    %v817 = vadd.f32 %v785, 0.5
    %v818 = vadd.f32 %v786, 0.5
    %v819 = vadd.f32 %v787, 0.5
    %v820 = vadd.f32 %v788, 0.5
    %v821 = vadd.f32 %v789, 0.5
    %v822 = vadd.f32 %v790, 0.5
    %v823 = vadd.f32 %v791, 0.5
    %v824 = vadd.f32 %v792, 0.5
    %v825 = vadd.f32 %v793, 0.5
    %v826 = vld [vmem:[%s2] sm:$0xff]
    %v827 = vld [vmem:[%s2 + $0x8] sm:$0xff]
    %v828 = vld [vmem:[%s2 + $0x10] sm:$0xff]
    %v829 = vld [vmem:[%s2 + $0x18] sm:$0xff]
    %v830 = vld [vmem:[%s2 + $0x20] sm:$0xff]
    %v831 = vld [vmem:[%s2 + $0x28] sm:$0xff]
    %v832 = vld [vmem:[%s2 + $0x30] sm:$0xff]
    %v833 = vld [vmem:[%s2 + $0x38] sm:$0xff]
    %v834 = vld [vmem:[%s2 + $0x40] sm:$0xff]
    %v835 = vld [vmem:[%s2 + $0x48] sm:$0xff]
    %v836 = vld [vmem:[%s2 + $0x50] sm:$0xff]
    %v837 = vld [vmem:[%s2 + $0x58] sm:$0xff]
    %v838 = vld [vmem:[%s2 + $0x60] sm:$0xff]
    %v839 = vld [vmem:[%s2 + $0x68] sm:$0xff]
    %v840 = vld [vmem:[%s2 + $0x70] sm:$0xff]
    %v841 = vld [vmem:[%s2 + $0x78] sm:$0xff]
    %v842 = vld [vmem:[%s6] sm:$0x1]
    %v844 = vperm.slane %v842, 0
    %846 = vmatpush.msra.mxu0 %v841
    %847 = vmatpush.msra.mxu0 %v840
    %848 = vmatpush.msra.mxu0 %v839
    %849 = vmatpush.msra.mxu0 %v838
    %850 = vmatpush.msra.mxu0 %v837
    %851 = vmatpush.msra.mxu0 %v836
    %852 = vmatpush.msra.mxu0 %v835
    %853 = vmatpush.msra.mxu0 %v834
    %854 = vmatpush.msra.mxu0 %v833
    %855 = vmatpush.msra.mxu0 %v832
    %856 = vmatpush.msra.mxu0 %v831
    %857 = vmatpush.msra.mxu0 %v830
    %858 = vmatpush.msra.mxu0 %v829
    %859 = vmatpush.msra.mxu0 %v828
    %860 = vmatpush.msra.mxu0 %v827
    %861 = vmatpush.msra.mxu0 %v826
    %862 = vmatmul.f32.gmra.mxu0 %v794
    %v863 = vpop.f32.mrf.mxu0
    %v864 = vadd.f32 %v844, %v863
    %865 = vmatmul.f32.gmra.mxu0 %v795
    %v866 = vpop.f32.mrf.mxu0
    %v867 = vadd.f32 %v844, %v866
    %868 = vmatmul.f32.gmra.mxu0 %v796
    %v869 = vpop.f32.mrf.mxu0
    %v870 = vadd.f32 %v844, %v869
    %871 = vmatmul.f32.gmra.mxu0 %v797
    %v872 = vpop.f32.mrf.mxu0
    %v873 = vadd.f32 %v844, %v872
    %874 = vmatmul.f32.gmra.mxu0 %v798
    %v875 = vpop.f32.mrf.mxu0
    %v876 = vadd.f32 %v844, %v875
    %877 = vmatmul.f32.gmra.mxu0 %v799
    %v878 = vpop.f32.mrf.mxu0
    %v879 = vadd.f32 %v844, %v878
    %880 = vmatmul.f32.gmra.mxu0 %v800
    %v881 = vpop.f32.mrf.mxu0
    %v882 = vadd.f32 %v844, %v881
    %883 = vmatmul.f32.gmra.mxu0 %v801
    %v884 = vpop.f32.mrf.mxu0
    %v885 = vadd.f32 %v844, %v884
    %886 = vmatmul.f32.gmra.mxu0 %v802
    %v887 = vpop.f32.mrf.mxu0
    %v888 = vadd.f32 %v844, %v887
    %889 = vmatmul.f32.gmra.mxu0 %v803
    %v890 = vpop.f32.mrf.mxu0
    %v891 = vadd.f32 %v844, %v890
    %892 = vmatmul.f32.gmra.mxu0 %v804
    %v893 = vpop.f32.mrf.mxu0
    %v894 = vadd.f32 %v844, %v893
    %895 = vmatmul.f32.gmra.mxu0 %v805
    %v896 = vpop.f32.mrf.mxu0
    %v897 = vadd.f32 %v844, %v896
    %898 = vmatmul.f32.gmra.mxu0 %v806
    %v899 = vpop.f32.mrf.mxu0
    %v900 = vadd.f32 %v844, %v899
    %901 = vmatmul.f32.gmra.mxu0 %v807
    %v902 = vpop.f32.mrf.mxu0
    %v903 = vadd.f32 %v844, %v902
    %904 = vmatmul.f32.gmra.mxu0 %v808
    %v905 = vpop.f32.mrf.mxu0
    %v906 = vadd.f32 %v844, %v905
    %907 = vmatmul.f32.gmra.mxu0 %v809
    %v908 = vpop.f32.mrf.mxu0
    %v909 = vadd.f32 %v844, %v908
    %910 = vmatmul.f32.gmra.mxu0 %v810
    %v911 = vpop.f32.mrf.mxu0
    %v912 = vadd.f32 %v844, %v911
    %913 = vmatmul.f32.gmra.mxu0 %v811
    %v914 = vpop.f32.mrf.mxu0
    %v915 = vadd.f32 %v844, %v914
    %916 = vmatmul.f32.gmra.mxu0 %v812
    %v917 = vpop.f32.mrf.mxu0
    %v918 = vadd.f32 %v844, %v917
    %919 = vmatmul.f32.gmra.mxu0 %v813
    %v920 = vpop.f32.mrf.mxu0
    %v921 = vadd.f32 %v844, %v920
    %922 = vmatmul.f32.gmra.mxu0 %v814
    %v923 = vpop.f32.mrf.mxu0
    %v924 = vadd.f32 %v844, %v923
    %925 = vmatmul.f32.gmra.mxu0 %v815
    %v926 = vpop.f32.mrf.mxu0
    %v927 = vadd.f32 %v844, %v926
    %928 = vmatmul.f32.gmra.mxu0 %v816
    %v929 = vpop.f32.mrf.mxu0
    %v930 = vadd.f32 %v844, %v929
    %931 = vmatmul.f32.gmra.mxu0 %v817
    %v932 = vpop.f32.mrf.mxu0
    %v933 = vadd.f32 %v844, %v932
    %934 = vmatmul.f32.gmra.mxu0 %v818
    %v935 = vpop.f32.mrf.mxu0
    %v936 = vadd.f32 %v844, %v935
    %937 = vmatmul.f32.gmra.mxu0 %v819
    %v938 = vpop.f32.mrf.mxu0
    %v939 = vadd.f32 %v844, %v938
    %940 = vmatmul.f32.gmra.mxu0 %v820
    %v941 = vpop.f32.mrf.mxu0
    %v942 = vadd.f32 %v844, %v941
    %943 = vmatmul.f32.gmra.mxu0 %v821
    %v944 = vpop.f32.mrf.mxu0
    %v945 = vadd.f32 %v844, %v944
    %946 = vmatmul.f32.gmra.mxu0 %v822
    %v947 = vpop.f32.mrf.mxu0
    %v948 = vadd.f32 %v844, %v947
    %949 = vmatmul.f32.gmra.mxu0 %v823
    %v950 = vpop.f32.mrf.mxu0
    %v951 = vadd.f32 %v844, %v950
    %952 = vmatmul.f32.gmra.mxu0 %v824
    %v953 = vpop.f32.mrf.mxu0
    %v954 = vadd.f32 %v844, %v953
    %955 = vmatmul.f32.gmra.mxu0 %v825
    %v956 = vpop.f32.mrf.mxu0
    %v957 = vadd.f32 %v844, %v956
    %958 = vdwg.mxu0
    %v959 = vmul.f32 %v864, 0.5
    %v960 = vmul.f32 %v867, 0.5
    %v961 = vmul.f32 %v870, 0.5
    %v962 = vmul.f32 %v873, 0.5
    %v963 = vmul.f32 %v876, 0.5
    %v964 = vmul.f32 %v879, 0.5
    %v965 = vmul.f32 %v882, 0.5
    %v966 = vmul.f32 %v885, 0.5
    %v967 = vmul.f32 %v888, 0.5
    %v968 = vmul.f32 %v891, 0.5
    %v969 = vmul.f32 %v894, 0.5
    %v970 = vmul.f32 %v897, 0.5
    %v971 = vmul.f32 %v900, 0.5
    %v972 = vmul.f32 %v903, 0.5
    %v973 = vmul.f32 %v906, 0.5
    %v974 = vmul.f32 %v909, 0.5
    %v975 = vmul.f32 %v912, 0.5
    %v976 = vmul.f32 %v915, 0.5
    %v977 = vmul.f32 %v918, 0.5
    %v978 = vmul.f32 %v921, 0.5
    %v979 = vmul.f32 %v924, 0.5
    %v980 = vmul.f32 %v927, 0.5
    %v981 = vmul.f32 %v930, 0.5
    %v982 = vmul.f32 %v933, 0.5
    %v983 = vmul.f32 %v936, 0.5
    %v984 = vmul.f32 %v939, 0.5
    %v985 = vmul.f32 %v942, 0.5
    %v986 = vmul.f32 %v945, 0.5
    %v987 = vmul.f32 %v948, 0.5
    %v988 = vmul.f32 %v951, 0.5
    %v989 = vmul.f32 %v954, 0.5
    %v990 = vmul.f32 %v957, 0.5
    %v991 = vtanh.pop %v959
    %v992 = vtanh.pop %v960
    %v993 = vtanh.pop %v961
    %v994 = vtanh.pop %v962
    %v995 = vtanh.pop %v963
    %v996 = vtanh.pop %v964
    %v997 = vtanh.pop %v965
    %v998 = vtanh.pop %v966
    %v999 = vtanh.pop %v967
    %v1000 = vtanh.pop %v968
    %v1001 = vtanh.pop %v969
    %v1002 = vtanh.pop %v970
    %v1003 = vtanh.pop %v971
    %v1004 = vtanh.pop %v972
    %v1005 = vtanh.pop %v973
    %v1006 = vtanh.pop %v974
    %v1007 = vtanh.pop %v975
    %v1008 = vtanh.pop %v976
    %v1009 = vtanh.pop %v977
    %v1010 = vtanh.pop %v978
    %v1011 = vtanh.pop %v979
    %v1012 = vtanh.pop %v980
    %v1013 = vtanh.pop %v981
    %v1014 = vtanh.pop %v982
    %v1015 = vtanh.pop %v983
    %v1016 = vtanh.pop %v984
    %v1017 = vtanh.pop %v985
    %v1018 = vtanh.pop %v986
    %v1019 = vtanh.pop %v987
    %v1020 = vtanh.pop %v988
    %v1021 = vtanh.pop %v989
    %v1022 = vtanh.pop %v990
    %v1023 = vmul.f32 %v991, 0.5
    %v1024 = vmul.f32 %v992, 0.5
    %v1025 = vmul.f32 %v993, 0.5
    %v1026 = vmul.f32 %v994, 0.5
    %v1027 = vmul.f32 %v995, 0.5
    %v1028 = vmul.f32 %v996, 0.5
    %v1029 = vmul.f32 %v997, 0.5
    %v1030 = vmul.f32 %v998, 0.5
    %v1031 = vmul.f32 %v999, 0.5
    %v1032 = vmul.f32 %v1000, 0.5
    %v1033 = vmul.f32 %v1001, 0.5
    %v1034 = vmul.f32 %v1002, 0.5
    %v1035 = vmul.f32 %v1003, 0.5
    %v1036 = vmul.f32 %v1004, 0.5
    %v1037 = vmul.f32 %v1005, 0.5
    %v1038 = vmul.f32 %v1006, 0.5
    %v1039 = vmul.f32 %v1007, 0.5
    %v1040 = vmul.f32 %v1008, 0.5
    %v1041 = vmul.f32 %v1009, 0.5
    %v1042 = vmul.f32 %v1010, 0.5
    %v1043 = vmul.f32 %v1011, 0.5
    %v1044 = vmul.f32 %v1012, 0.5
    %v1045 = vmul.f32 %v1013, 0.5
    %v1046 = vmul.f32 %v1014, 0.5
    %v1047 = vmul.f32 %v1015, 0.5
    %v1048 = vmul.f32 %v1016, 0.5
    %v1049 = vmul.f32 %v1017, 0.5
    %v1050 = vmul.f32 %v1018, 0.5
    %v1051 = vmul.f32 %v1019, 0.5
    %v1052 = vmul.f32 %v1020, 0.5
    %v1053 = vmul.f32 %v1021, 0.5
    %v1054 = vmul.f32 %v1022, 0.5
    %v1055 = vadd.f32 %v1023, 0.5
    %v1056 = vadd.f32 %v1024, 0.5
    %v1057 = vadd.f32 %v1025, 0.5
    %v1058 = vadd.f32 %v1026, 0.5
    %v1059 = vadd.f32 %v1027, 0.5
    %v1060 = vadd.f32 %v1028, 0.5
    %v1061 = vadd.f32 %v1029, 0.5
    %v1062 = vadd.f32 %v1030, 0.5
    %v1063 = vadd.f32 %v1031, 0.5
    %v1064 = vadd.f32 %v1032, 0.5
    %v1065 = vadd.f32 %v1033, 0.5
    %v1066 = vadd.f32 %v1034, 0.5
    %v1067 = vadd.f32 %v1035, 0.5
    %v1068 = vadd.f32 %v1036, 0.5
    %v1069 = vadd.f32 %v1037, 0.5
    %v1070 = vadd.f32 %v1038, 0.5
    %v1071 = vadd.f32 %v1039, 0.5
    %v1072 = vadd.f32 %v1040, 0.5
    %v1073 = vadd.f32 %v1041, 0.5
    %v1074 = vadd.f32 %v1042, 0.5
    %v1075 = vadd.f32 %v1043, 0.5
    %v1076 = vadd.f32 %v1044, 0.5
    %v1077 = vadd.f32 %v1045, 0.5
    %v1078 = vadd.f32 %v1046, 0.5
    %v1079 = vadd.f32 %v1047, 0.5
    %v1080 = vadd.f32 %v1048, 0.5
    %v1081 = vadd.f32 %v1049, 0.5
    %v1082 = vadd.f32 %v1050, 0.5
    %v1083 = vadd.f32 %v1051, 0.5
    %v1084 = vadd.f32 %v1052, 0.5
    %v1085 = vadd.f32 %v1053, 0.5
    %v1086 = vadd.f32 %v1054, 0.5
    %v1087 = vld [vmem:[%s3] sm:$0xff]
    %v1088 = vld [vmem:[%s3 + $0x8] sm:$0xff]
    %v1089 = vld [vmem:[%s3 + $0x10] sm:$0xff]
    %v1090 = vld [vmem:[%s3 + $0x18] sm:$0xff]
    %v1091 = vld [vmem:[%s3 + $0x20] sm:$0xff]
    %v1092 = vld [vmem:[%s3 + $0x28] sm:$0xff]
    %v1093 = vld [vmem:[%s3 + $0x30] sm:$0xff]
    %v1094 = vld [vmem:[%s3 + $0x38] sm:$0xff]
    %v1095 = vld [vmem:[%s3 + $0x40] sm:$0xff]
    %v1096 = vld [vmem:[%s3 + $0x48] sm:$0xff]
    %v1097 = vld [vmem:[%s3 + $0x50] sm:$0xff]
    %v1098 = vld [vmem:[%s3 + $0x58] sm:$0xff]
    %v1099 = vld [vmem:[%s3 + $0x60] sm:$0xff]
    %v1100 = vld [vmem:[%s3 + $0x68] sm:$0xff]
    %v1101 = vld [vmem:[%s3 + $0x70] sm:$0xff]
    %v1102 = vld [vmem:[%s3 + $0x78] sm:$0xff]
    %v1103 = vld [vmem:[%s7] sm:$0x1]
    %v1105 = vperm.slane %v1103, 0
    %1107 = vmatpush.msra.mxu0 %v1102
    %1108 = vmatpush.msra.mxu0 %v1101
    %1109 = vmatpush.msra.mxu0 %v1100
    %1110 = vmatpush.msra.mxu0 %v1099
    %1111 = vmatpush.msra.mxu0 %v1098
    %1112 = vmatpush.msra.mxu0 %v1097
    %1113 = vmatpush.msra.mxu0 %v1096
    %1114 = vmatpush.msra.mxu0 %v1095
    %1115 = vmatpush.msra.mxu0 %v1094
    %1116 = vmatpush.msra.mxu0 %v1093
    %1117 = vmatpush.msra.mxu0 %v1092
    %1118 = vmatpush.msra.mxu0 %v1091
    %1119 = vmatpush.msra.mxu0 %v1090
    %1120 = vmatpush.msra.mxu0 %v1089
    %1121 = vmatpush.msra.mxu0 %v1088
    %1122 = vmatpush.msra.mxu0 %v1087
    %1123 = vmatmul.f32.gmra.mxu0 %v1055
    %v1124 = vpop.f32.mrf.mxu0
    %v1125 = vadd.f32 %v1105, %v1124
    %1126 = vmatmul.f32.gmra.mxu0 %v1056
    %v1127 = vpop.f32.mrf.mxu0
    %v1128 = vadd.f32 %v1105, %v1127
    %1129 = vmatmul.f32.gmra.mxu0 %v1057
    %v1130 = vpop.f32.mrf.mxu0
    %v1131 = vadd.f32 %v1105, %v1130
    %1132 = vmatmul.f32.gmra.mxu0 %v1058
    %v1133 = vpop.f32.mrf.mxu0
    %v1134 = vadd.f32 %v1105, %v1133
    %1135 = vmatmul.f32.gmra.mxu0 %v1059
    %v1136 = vpop.f32.mrf.mxu0
    %v1137 = vadd.f32 %v1105, %v1136
    %1138 = vmatmul.f32.gmra.mxu0 %v1060
    %v1139 = vpop.f32.mrf.mxu0
    %v1140 = vadd.f32 %v1105, %v1139
    %1141 = vmatmul.f32.gmra.mxu0 %v1061
    %v1142 = vpop.f32.mrf.mxu0
    %v1143 = vadd.f32 %v1105, %v1142
    %1144 = vmatmul.f32.gmra.mxu0 %v1062
    %v1145 = vpop.f32.mrf.mxu0
    %v1146 = vadd.f32 %v1105, %v1145
    %1147 = vmatmul.f32.gmra.mxu0 %v1063
    %v1148 = vpop.f32.mrf.mxu0
    %v1149 = vadd.f32 %v1105, %v1148
    %1150 = vmatmul.f32.gmra.mxu0 %v1064
    %v1151 = vpop.f32.mrf.mxu0
    %v1152 = vadd.f32 %v1105, %v1151
    %1153 = vmatmul.f32.gmra.mxu0 %v1065
    %v1154 = vpop.f32.mrf.mxu0
    %v1155 = vadd.f32 %v1105, %v1154
    %1156 = vmatmul.f32.gmra.mxu0 %v1066
    %v1157 = vpop.f32.mrf.mxu0
    %v1158 = vadd.f32 %v1105, %v1157
    %1159 = vmatmul.f32.gmra.mxu0 %v1067
    %v1160 = vpop.f32.mrf.mxu0
    %v1161 = vadd.f32 %v1105, %v1160
    %1162 = vmatmul.f32.gmra.mxu0 %v1068
    %v1163 = vpop.f32.mrf.mxu0
    %v1164 = vadd.f32 %v1105, %v1163
    %1165 = vmatmul.f32.gmra.mxu0 %v1069
    %v1166 = vpop.f32.mrf.mxu0
    %v1167 = vadd.f32 %v1105, %v1166
    %1168 = vmatmul.f32.gmra.mxu0 %v1070
    %v1169 = vpop.f32.mrf.mxu0
    %v1170 = vadd.f32 %v1105, %v1169
    %1171 = vmatmul.f32.gmra.mxu0 %v1071
    %v1172 = vpop.f32.mrf.mxu0
    %v1173 = vadd.f32 %v1105, %v1172
    %1174 = vmatmul.f32.gmra.mxu0 %v1072
    %v1175 = vpop.f32.mrf.mxu0
    %v1176 = vadd.f32 %v1105, %v1175
    %1177 = vmatmul.f32.gmra.mxu0 %v1073
    %v1178 = vpop.f32.mrf.mxu0
    %v1179 = vadd.f32 %v1105, %v1178
    %1180 = vmatmul.f32.gmra.mxu0 %v1074
    %v1181 = vpop.f32.mrf.mxu0
    %v1182 = vadd.f32 %v1105, %v1181
    %1183 = vmatmul.f32.gmra.mxu0 %v1075
    %v1184 = vpop.f32.mrf.mxu0
    %v1185 = vadd.f32 %v1105, %v1184
    %1186 = vmatmul.f32.gmra.mxu0 %v1076
    %v1187 = vpop.f32.mrf.mxu0
    %v1188 = vadd.f32 %v1105, %v1187
    %1189 = vmatmul.f32.gmra.mxu0 %v1077
    %v1190 = vpop.f32.mrf.mxu0
    %v1191 = vadd.f32 %v1105, %v1190
    %1192 = vmatmul.f32.gmra.mxu0 %v1078
    %v1193 = vpop.f32.mrf.mxu0
    %v1194 = vadd.f32 %v1105, %v1193
    %1195 = vmatmul.f32.gmra.mxu0 %v1079
    %v1196 = vpop.f32.mrf.mxu0
    %v1197 = vadd.f32 %v1105, %v1196
    %1198 = vmatmul.f32.gmra.mxu0 %v1080
    %v1199 = vpop.f32.mrf.mxu0
    %v1200 = vadd.f32 %v1105, %v1199
    %1201 = vmatmul.f32.gmra.mxu0 %v1081
    %v1202 = vpop.f32.mrf.mxu0
    %v1203 = vadd.f32 %v1105, %v1202
    %1204 = vmatmul.f32.gmra.mxu0 %v1082
    %v1205 = vpop.f32.mrf.mxu0
    %v1206 = vadd.f32 %v1105, %v1205
    %1207 = vmatmul.f32.gmra.mxu0 %v1083
    %v1208 = vpop.f32.mrf.mxu0
    %v1209 = vadd.f32 %v1105, %v1208
    %1210 = vmatmul.f32.gmra.mxu0 %v1084
    %v1211 = vpop.f32.mrf.mxu0
    %v1212 = vadd.f32 %v1105, %v1211
    %1213 = vmatmul.f32.gmra.mxu0 %v1085
    %v1214 = vpop.f32.mrf.mxu0
    %v1215 = vadd.f32 %v1105, %v1214
    %1216 = vmatmul.f32.gmra.mxu0 %v1086
    %v1217 = vpop.f32.mrf.mxu0
    %v1218 = vadd.f32 %v1105, %v1217
    %1219 = vdwg.mxu0
    %v1220 = vmul.f32 %v1125, 0.5
    %v1221 = vmul.f32 %v1128, 0.5
    %v1222 = vmul.f32 %v1131, 0.5
    %v1223 = vmul.f32 %v1134, 0.5
    %v1224 = vmul.f32 %v1137, 0.5
    %v1225 = vmul.f32 %v1140, 0.5
    %v1226 = vmul.f32 %v1143, 0.5
    %v1227 = vmul.f32 %v1146, 0.5
    %v1228 = vmul.f32 %v1149, 0.5
    %v1229 = vmul.f32 %v1152, 0.5
    %v1230 = vmul.f32 %v1155, 0.5
    %v1231 = vmul.f32 %v1158, 0.5
    %v1232 = vmul.f32 %v1161, 0.5
    %v1233 = vmul.f32 %v1164, 0.5
    %v1234 = vmul.f32 %v1167, 0.5
    %v1235 = vmul.f32 %v1170, 0.5
    %v1236 = vmul.f32 %v1173, 0.5
    %v1237 = vmul.f32 %v1176, 0.5
    %v1238 = vmul.f32 %v1179, 0.5
    %v1239 = vmul.f32 %v1182, 0.5
    %v1240 = vmul.f32 %v1185, 0.5
    %v1241 = vmul.f32 %v1188, 0.5
    %v1242 = vmul.f32 %v1191, 0.5
    %v1243 = vmul.f32 %v1194, 0.5
    %v1244 = vmul.f32 %v1197, 0.5
    %v1245 = vmul.f32 %v1200, 0.5
    %v1246 = vmul.f32 %v1203, 0.5
    %v1247 = vmul.f32 %v1206, 0.5
    %v1248 = vmul.f32 %v1209, 0.5
    %v1249 = vmul.f32 %v1212, 0.5
    %v1250 = vmul.f32 %v1215, 0.5
    %v1251 = vmul.f32 %v1218, 0.5
    %v1252 = vtanh.pop %v1220
    %v1253 = vtanh.pop %v1221
    %v1254 = vtanh.pop %v1222
    %v1255 = vtanh.pop %v1223
    %v1256 = vtanh.pop %v1224
    %v1257 = vtanh.pop %v1225
    %v1258 = vtanh.pop %v1226
    %v1259 = vtanh.pop %v1227
    %v1260 = vtanh.pop %v1228
    %v1261 = vtanh.pop %v1229
    %v1262 = vtanh.pop %v1230
    %v1263 = vtanh.pop %v1231
    %v1264 = vtanh.pop %v1232
    %v1265 = vtanh.pop %v1233
    %v1266 = vtanh.pop %v1234
    %v1267 = vtanh.pop %v1235
    %v1268 = vtanh.pop %v1236
    %v1269 = vtanh.pop %v1237
    %v1270 = vtanh.pop %v1238
    %v1271 = vtanh.pop %v1239
    %v1272 = vtanh.pop %v1240
    %v1273 = vtanh.pop %v1241
    %v1274 = vtanh.pop %v1242
    %v1275 = vtanh.pop %v1243
    %v1276 = vtanh.pop %v1244
    %v1277 = vtanh.pop %v1245
    %v1278 = vtanh.pop %v1246
    %v1279 = vtanh.pop %v1247
    %v1280 = vtanh.pop %v1248
    %v1281 = vtanh.pop %v1249
    %v1282 = vtanh.pop %v1250
    %v1283 = vtanh.pop %v1251
    %v1284 = vmul.f32 %v1252, 0.5
    %v1285 = vmul.f32 %v1253, 0.5
    %v1286 = vmul.f32 %v1254, 0.5
    %v1287 = vmul.f32 %v1255, 0.5
    %v1288 = vmul.f32 %v1256, 0.5
    %v1289 = vmul.f32 %v1257, 0.5
    %v1290 = vmul.f32 %v1258, 0.5
    %v1291 = vmul.f32 %v1259, 0.5
    %v1292 = vmul.f32 %v1260, 0.5
    %v1293 = vmul.f32 %v1261, 0.5
    %v1294 = vmul.f32 %v1262, 0.5
    %v1295 = vmul.f32 %v1263, 0.5
    %v1296 = vmul.f32 %v1264, 0.5
    %v1297 = vmul.f32 %v1265, 0.5
    %v1298 = vmul.f32 %v1266, 0.5
    %v1299 = vmul.f32 %v1267, 0.5
    %v1300 = vmul.f32 %v1268, 0.5
    %v1301 = vmul.f32 %v1269, 0.5
    %v1302 = vmul.f32 %v1270, 0.5
    %v1303 = vmul.f32 %v1271, 0.5
    %v1304 = vmul.f32 %v1272, 0.5
    %v1305 = vmul.f32 %v1273, 0.5
    %v1306 = vmul.f32 %v1274, 0.5
    %v1307 = vmul.f32 %v1275, 0.5
    %v1308 = vmul.f32 %v1276, 0.5
    %v1309 = vmul.f32 %v1277, 0.5
    %v1310 = vmul.f32 %v1278, 0.5
    %v1311 = vmul.f32 %v1279, 0.5
    %v1312 = vmul.f32 %v1280, 0.5
    %v1313 = vmul.f32 %v1281, 0.5
    %v1314 = vmul.f32 %v1282, 0.5
    %v1315 = vmul.f32 %v1283, 0.5
    %v1316 = vadd.f32 %v1284, 0.5
    %v1317 = vadd.f32 %v1285, 0.5
    %v1318 = vadd.f32 %v1286, 0.5
    %v1319 = vadd.f32 %v1287, 0.5
    %v1320 = vadd.f32 %v1288, 0.5
    %v1321 = vadd.f32 %v1289, 0.5
    %v1322 = vadd.f32 %v1290, 0.5
    %v1323 = vadd.f32 %v1291, 0.5
    %v1324 = vadd.f32 %v1292, 0.5
    %v1325 = vadd.f32 %v1293, 0.5
    %v1326 = vadd.f32 %v1294, 0.5
    %v1327 = vadd.f32 %v1295, 0.5
    %v1328 = vadd.f32 %v1296, 0.5
    %v1329 = vadd.f32 %v1297, 0.5
    %v1330 = vadd.f32 %v1298, 0.5
    %v1331 = vadd.f32 %v1299, 0.5
    %v1332 = vadd.f32 %v1300, 0.5
    %v1333 = vadd.f32 %v1301, 0.5
    %v1334 = vadd.f32 %v1302, 0.5
    %v1335 = vadd.f32 %v1303, 0.5
    %v1336 = vadd.f32 %v1304, 0.5
    %v1337 = vadd.f32 %v1305, 0.5
    %v1338 = vadd.f32 %v1306, 0.5
    %v1339 = vadd.f32 %v1307, 0.5
    %v1340 = vadd.f32 %v1308, 0.5
    %v1341 = vadd.f32 %v1309, 0.5
    %v1342 = vadd.f32 %v1310, 0.5
    %v1343 = vadd.f32 %v1311, 0.5
    %v1344 = vadd.f32 %v1312, 0.5
    %v1345 = vadd.f32 %v1313, 0.5
    %v1346 = vadd.f32 %v1314, 0.5
    %v1347 = vadd.f32 %v1315, 0.5
    %v1348 = vld [vmem:[#allocation2] sm:$0xff]
    %v1349 = vld [vmem:[#allocation2 + $0x8] sm:$0xff]
    %v1350 = vld [vmem:[#allocation2 + $0x10] sm:$0xff]
    %v1351 = vld [vmem:[#allocation2 + $0x18] sm:$0xff]
    %v1352 = vld [vmem:[#allocation2 + $0x20] sm:$0xff]
    %v1353 = vld [vmem:[#allocation2 + $0x28] sm:$0xff]
    %v1354 = vld [vmem:[#allocation2 + $0x30] sm:$0xff]
    %v1355 = vld [vmem:[#allocation2 + $0x38] sm:$0xff]
    %v1356 = vld [vmem:[#allocation2 + $0x40] sm:$0xff]
    %v1357 = vld [vmem:[#allocation2 + $0x48] sm:$0xff]
    %v1358 = vld [vmem:[#allocation2 + $0x50] sm:$0xff]
    %v1359 = vld [vmem:[#allocation2 + $0x58] sm:$0xff]
    %v1360 = vld [vmem:[#allocation2 + $0x60] sm:$0xff]
    %v1361 = vld [vmem:[#allocation2 + $0x68] sm:$0xff]
    %v1362 = vld [vmem:[#allocation2 + $0x70] sm:$0xff]
    %v1363 = vld [vmem:[#allocation2 + $0x78] sm:$0xff]
    %v1364 = vld [vmem:[%s8] sm:$0x1]
    %v1366 = vperm.slane %v1364, 0
    %1368 = vmatpush.msra.mxu0 %v1363
    %1369 = vmatpush.msra.mxu0 %v1362
    %1370 = vmatpush.msra.mxu0 %v1361
    %1371 = vmatpush.msra.mxu0 %v1360
    %1372 = vmatpush.msra.mxu0 %v1359
    %1373 = vmatpush.msra.mxu0 %v1358
    %1374 = vmatpush.msra.mxu0 %v1357
    %1375 = vmatpush.msra.mxu0 %v1356
    %1376 = vmatpush.msra.mxu0 %v1355
    %1377 = vmatpush.msra.mxu0 %v1354
    %1378 = vmatpush.msra.mxu0 %v1353
    %1379 = vmatpush.msra.mxu0 %v1352
    %1380 = vmatpush.msra.mxu0 %v1351
    %1381 = vmatpush.msra.mxu0 %v1350
    %1382 = vmatpush.msra.mxu0 %v1349
    %1383 = vmatpush.msra.mxu0 %v1348
    %1384 = vmatmul.f32.gmra.mxu0 %v1316
    %v1385 = vpop.f32.mrf.mxu0
    %v1386 = vadd.f32 %v1366, %v1385
    %1387 = vmatmul.f32.gmra.mxu0 %v1317
    %v1388 = vpop.f32.mrf.mxu0
    %v1389 = vadd.f32 %v1366, %v1388
    %1390 = vmatmul.f32.gmra.mxu0 %v1318
    %v1391 = vpop.f32.mrf.mxu0
    %v1392 = vadd.f32 %v1366, %v1391
    %1393 = vmatmul.f32.gmra.mxu0 %v1319
    %v1394 = vpop.f32.mrf.mxu0
    %v1395 = vadd.f32 %v1366, %v1394
    %1396 = vmatmul.f32.gmra.mxu0 %v1320
    %v1397 = vpop.f32.mrf.mxu0
    %v1398 = vadd.f32 %v1366, %v1397
    %1399 = vmatmul.f32.gmra.mxu0 %v1321
    %v1400 = vpop.f32.mrf.mxu0
    %v1401 = vadd.f32 %v1366, %v1400
    %1402 = vmatmul.f32.gmra.mxu0 %v1322
    %v1403 = vpop.f32.mrf.mxu0
    %v1404 = vadd.f32 %v1366, %v1403
    %1405 = vmatmul.f32.gmra.mxu0 %v1323
    %v1406 = vpop.f32.mrf.mxu0
    %v1407 = vadd.f32 %v1366, %v1406
    %1408 = vmatmul.f32.gmra.mxu0 %v1324
    %v1409 = vpop.f32.mrf.mxu0
    %v1410 = vadd.f32 %v1366, %v1409
    %1411 = vmatmul.f32.gmra.mxu0 %v1325
    %v1412 = vpop.f32.mrf.mxu0
    %v1413 = vadd.f32 %v1366, %v1412
    %1414 = vmatmul.f32.gmra.mxu0 %v1326
    %v1415 = vpop.f32.mrf.mxu0
    %v1416 = vadd.f32 %v1366, %v1415
    %1417 = vmatmul.f32.gmra.mxu0 %v1327
    %v1418 = vpop.f32.mrf.mxu0
    %v1419 = vadd.f32 %v1366, %v1418
    %1420 = vmatmul.f32.gmra.mxu0 %v1328
    %v1421 = vpop.f32.mrf.mxu0
    %v1422 = vadd.f32 %v1366, %v1421
    %1423 = vmatmul.f32.gmra.mxu0 %v1329
    %v1424 = vpop.f32.mrf.mxu0
    %v1425 = vadd.f32 %v1366, %v1424
    %1426 = vmatmul.f32.gmra.mxu0 %v1330
    %v1427 = vpop.f32.mrf.mxu0
    %v1428 = vadd.f32 %v1366, %v1427
    %1429 = vmatmul.f32.gmra.mxu0 %v1331
    %v1430 = vpop.f32.mrf.mxu0
    %v1431 = vadd.f32 %v1366, %v1430
    %1432 = vmatmul.f32.gmra.mxu0 %v1332
    %v1433 = vpop.f32.mrf.mxu0
    %v1434 = vadd.f32 %v1366, %v1433
    %1435 = vmatmul.f32.gmra.mxu0 %v1333
    %v1436 = vpop.f32.mrf.mxu0
    %v1437 = vadd.f32 %v1366, %v1436
    %1438 = vmatmul.f32.gmra.mxu0 %v1334
    %v1439 = vpop.f32.mrf.mxu0
    %v1440 = vadd.f32 %v1366, %v1439
    %1441 = vmatmul.f32.gmra.mxu0 %v1335
    %v1442 = vpop.f32.mrf.mxu0
    %v1443 = vadd.f32 %v1366, %v1442
    %1444 = vmatmul.f32.gmra.mxu0 %v1336
    %v1445 = vpop.f32.mrf.mxu0
    %v1446 = vadd.f32 %v1366, %v1445
    %1447 = vmatmul.f32.gmra.mxu0 %v1337
    %v1448 = vpop.f32.mrf.mxu0
    %v1449 = vadd.f32 %v1366, %v1448
    %1450 = vmatmul.f32.gmra.mxu0 %v1338
    %v1451 = vpop.f32.mrf.mxu0
    %v1452 = vadd.f32 %v1366, %v1451
    %1453 = vmatmul.f32.gmra.mxu0 %v1339
    %v1454 = vpop.f32.mrf.mxu0
    %v1455 = vadd.f32 %v1366, %v1454
    %1456 = vmatmul.f32.gmra.mxu0 %v1340
    %v1457 = vpop.f32.mrf.mxu0
    %v1458 = vadd.f32 %v1366, %v1457
    %1459 = vmatmul.f32.gmra.mxu0 %v1341
    %v1460 = vpop.f32.mrf.mxu0
    %v1461 = vadd.f32 %v1366, %v1460
    %1462 = vmatmul.f32.gmra.mxu0 %v1342
    %v1463 = vpop.f32.mrf.mxu0
    %v1464 = vadd.f32 %v1366, %v1463
    %1465 = vmatmul.f32.gmra.mxu0 %v1343
    %v1466 = vpop.f32.mrf.mxu0
    %v1467 = vadd.f32 %v1366, %v1466
    %1468 = vmatmul.f32.gmra.mxu0 %v1344
    %v1469 = vpop.f32.mrf.mxu0
    %v1470 = vadd.f32 %v1366, %v1469
    %1471 = vmatmul.f32.gmra.mxu0 %v1345
    %v1472 = vpop.f32.mrf.mxu0
    %v1473 = vadd.f32 %v1366, %v1472
    %1474 = vmatmul.f32.gmra.mxu0 %v1346
    %v1475 = vpop.f32.mrf.mxu0
    %v1476 = vadd.f32 %v1366, %v1475
    %1477 = vmatmul.f32.gmra.mxu0 %v1347
    %v1478 = vpop.f32.mrf.mxu0
    %v1479 = vadd.f32 %v1366, %v1478
    %1480 = vdwg.mxu0
    %vm1481 = vcmask 23552
    %1482 = vst.msk [vmem:[%s9] sm:$0xff] %vm1481, %v1386
    %1483 = vst.msk [vmem:[%s9 + $0x8] sm:$0xff] %vm1481, %v1389
    %1484 = vst.msk [vmem:[%s9 + $0x10] sm:$0xff] %vm1481, %v1392
    %1485 = vst.msk [vmem:[%s9 + $0x18] sm:$0xff] %vm1481, %v1395
    %1486 = vst.msk [vmem:[%s9 + $0x20] sm:$0xff] %vm1481, %v1398
    %1487 = vst.msk [vmem:[%s9 + $0x28] sm:$0xff] %vm1481, %v1401
    %1488 = vst.msk [vmem:[%s9 + $0x30] sm:$0xff] %vm1481, %v1404
    %1489 = vst.msk [vmem:[%s9 + $0x38] sm:$0xff] %vm1481, %v1407
    %1490 = vst.msk [vmem:[%s9 + $0x40] sm:$0xff] %vm1481, %v1410
    %1491 = vst.msk [vmem:[%s9 + $0x48] sm:$0xff] %vm1481, %v1413
    %1492 = vst.msk [vmem:[%s9 + $0x50] sm:$0xff] %vm1481, %v1416
    %1493 = vst.msk [vmem:[%s9 + $0x58] sm:$0xff] %vm1481, %v1419
    %1494 = vst.msk [vmem:[%s9 + $0x60] sm:$0xff] %vm1481, %v1422
    %1495 = vst.msk [vmem:[%s9 + $0x68] sm:$0xff] %vm1481, %v1425
    %1496 = vst.msk [vmem:[%s9 + $0x70] sm:$0xff] %vm1481, %v1428
    %1497 = vst.msk [vmem:[%s9 + $0x78] sm:$0xff] %vm1481, %v1431
    %1498 = vst.msk [vmem:[%s9 + $0x80] sm:$0xff] %vm1481, %v1434
    %1499 = vst.msk [vmem:[%s9 + $0x88] sm:$0xff] %vm1481, %v1437
    %1500 = vst.msk [vmem:[%s9 + $0x90] sm:$0xff] %vm1481, %v1440
    %1501 = vst.msk [vmem:[%s9 + $0x98] sm:$0xff] %vm1481, %v1443
    %1502 = vst.msk [vmem:[%s9 + $0xa0] sm:$0xff] %vm1481, %v1446
    %1503 = vst.msk [vmem:[%s9 + $0xa8] sm:$0xff] %vm1481, %v1449
    %1504 = vst.msk [vmem:[%s9 + $0xb0] sm:$0xff] %vm1481, %v1452
    %1505 = vst.msk [vmem:[%s9 + $0xb8] sm:$0xff] %vm1481, %v1455
    %1506 = vst.msk [vmem:[%s9 + $0xc0] sm:$0xff] %vm1481, %v1458
    %1507 = vst.msk [vmem:[%s9 + $0xc8] sm:$0xff] %vm1481, %v1461
    %1508 = vst.msk [vmem:[%s9 + $0xd0] sm:$0xff] %vm1481, %v1464
    %1509 = vst.msk [vmem:[%s9 + $0xd8] sm:$0xff] %vm1481, %v1467
    %1510 = vst.msk [vmem:[%s9 + $0xe0] sm:$0xff] %vm1481, %v1470
    %1511 = vst.msk [vmem:[%s9 + $0xe8] sm:$0xff] %vm1481, %v1473
    %1512 = vst.msk [vmem:[%s9 + $0xf0] sm:$0xff] %vm1481, %v1476
    %1513 = vst.msk [vmem:[%s9 + $0xf8] sm:$0xff] %vm1481, %v1479
    // Predicated region
    $region42: #{tpu_custom_call.1} parent=1 // pred_check
      _
    $region43: #{tpu_custom_call.1} parent=1 // pred_check_branch
      %1515 = sbr.rel (0) target = $region45
    $region44: #{tpu_custom_call.1} parent=1 // pred_region
      _
    $region45: #{tpu_custom_call.1} parent=1 // pred_fallthru
      _
    // Predicated region
    $region46: #{tpu_custom_call.1} parent=1 // pred_check
      _
    $region47: #{tpu_custom_call.1} parent=1 // pred_check_branch
      %1517 = sbr.rel (0) target = $region49
    $region48: #{tpu_custom_call.1} parent=1 // pred_region
      _
    $region49: #{tpu_custom_call.1} parent=1 // pred_fallthru
      _
    %1518 = vsyncpa [#allocation3], 1

</llo_original>
